<compile_context>
chip_gen: v5e
topology: v5e:2x2
jax: 0.10.0
libtpu: 0.0.40
codegen_flags: <defaults>
</compile_context>

<pallas_src>
import functools

import jax
import jax.numpy as jnp
from jax.experimental import pallas as pl
from jax.experimental.pallas import tpu as pltpu

_LANES = 128
_SUBLANES = 8


def _round_up(x, m):
    return (x + m - 1) // m * m


# ---------------------------------------------------------------------------
# Fused kernel: time-chunked 2-layer LSTM recurrence + final fc
# ---------------------------------------------------------------------------
def _fused_rnn_kernel(x_ref, wih0_ref, whh0_ref, b0_ref,
                      w1_ref, b1_ref, wfc_ref, bfc_ref,
                      out_ref,
                      xw0_sc, h0_sc, c0_sc, h1_sc, c1_sc,
                      *, seq_len, chunk_len, batch_pad, hidden_dim,
                      needs_mask, unroll):
    H = hidden_dim
    Bp = batch_pad
    Tc = chunk_len
    chunk = pl.program_id(0)
    n_chunks = pl.num_programs(0)

    # Zero-init carried state on the first chunk (matches PyTorch default h0=c0=0).
    @pl.when(chunk == 0)
    def _init():
        z = jnp.zeros((Bp, H), jnp.float32)
        h0_sc[...] = z
        c0_sc[...] = z
        h1_sc[...] = z
        c1_sc[...] = z

    # Chunk prologue: layer-0 input projection for all T_chunk timesteps as ONE MXU matmul
    # (bf16 operands, f32 accumulation), staged in a small VMEM scratch.
    xw0_sc[...] = (
        jnp.dot(x_ref[...], wih0_ref[...], preferred_element_type=jnp.float32)
        + b0_ref[...]
    )

    # Hoist recurrent weights / bias out of the time loop (vreg/VMEM resident).
    whh0 = whh0_ref[...]   # (H, 4H)  bf16
    w1 = w1_ref[...]       # (2H, 4H) bf16 == [Wih1 ; Whh1] stacked
    b1 = b1_ref[...]       # (1, 4H)  f32

    def cell(gates, c_prev):
        # Full-vreg EUP: one sigmoid + one tanh over all 4H lanes, then per-gate slices.
        # PyTorch gate order [i, f, g, o].
        sig = jax.nn.sigmoid(gates)
        tnh = jnp.tanh(gates)
        i_g = sig[:, 0 * H:1 * H]
        f_g = sig[:, 1 * H:2 * H]
        o_g = sig[:, 3 * H:4 * H]
        g_g = tnh[:, 2 * H:3 * H]
        c_new = f_g * c_prev + i_g * g_g
        h_new = o_g * jnp.tanh(c_new)
        return h_new, c_new

    def step(i, carry):
        h0, c0, h1, c1 = carry
        row = pl.multiple_of(i * Bp, Bp)                 # sublane-aligned slice start
        xw0_t = xw0_sc[pl.ds(row, Bp), :]                # (Bp, 4H) f32

        # Layer 0: only the small recurrent matmul remains on the critical path.
        gates0 = xw0_t + jnp.dot(h0.astype(whh0.dtype), whh0,
                                 preferred_element_type=jnp.float32)
        h0n, c0n = cell(gates0, c0)

        # Layer 1: single fused matmul over the concatenated [h0_new | h1] state.
        hcat = jnp.concatenate([h0n, h1], axis=1).astype(w1.dtype)   # (Bp, 2H)
        gates1 = jnp.dot(hcat, w1, preferred_element_type=jnp.float32) + b1
        h1n, c1n = cell(gates1, c1)

        if needs_mask:
            # Only generated when seq_len % chunk_len != 0: freeze state on padded steps.
            valid = (chunk * Tc + i) < seq_len
            h0n = jnp.where(valid, h0n, h0)
            c0n = jnp.where(valid, c0n, c0)
            h1n = jnp.where(valid, h1n, h1)
            c1n = jnp.where(valid, c1n, c1)
        return h0n, c0n, h1n, c1n

    init = (h0_sc[...], c0_sc[...], h1_sc[...], c1_sc[...])
    h0, c0, h1, c1 = jax.lax.fori_loop(0, Tc, step, init, unroll=unroll)

    h0_sc[...] = h0
    c0_sc[...] = c0
    h1_sc[...] = h1
    c1_sc[...] = c1

    # Epilogue: fused fc on the last timestep's top-layer hidden state.
    # Output is lane-dense (Bp, 128): a single unmasked HBM writeback at grid end.
    @pl.when(chunk == n_chunks - 1)
    def _finalize():
        out_ref[...] = (
            jnp.dot(h1, wfc_ref[...], preferred_element_type=jnp.float32)
            + bfc_ref[...]
        ).astype(out_ref.dtype)


# ---------------------------------------------------------------------------
# Full model forward (matches PyTorch RNN.forward, eval mode)
# ---------------------------------------------------------------------------
def rnn_forward(text, params, *, chunk_timesteps=16, compute_dtype=jnp.bfloat16):
    # Embedding lookup (glue, plain JAX gather): (S, B) -> (S, B, E)
    embedded = jnp.take(params["embedding"], text, axis=0).astype(jnp.float32)
    S, B, E = embedded.shape
    H = params["w_hh_l0"].shape[1]
    OUT = params["w_fc"].shape[0]

    Bp = _round_up(B, _SUBLANES)
    OUTp = _round_up(OUT, _LANES)

    Tc = max(1, min(int(chunk_timesteps), S))
    n_chunks = pl.cdiv(S, Tc)
    S_pad = n_chunks * Tc
    needs_mask = (S_pad != S)
    unroll = min(Tc, 8)

    # Pad seq to chunk multiple and batch to a sublane multiple; padded rows/steps are dead
    # weight (masked / sliced off).  Matmul operands are cast to bf16.
    x = jnp.pad(embedded, ((0, S_pad - S), (0, Bp - B), (0, 0))).astype(compute_dtype)
    x_flat = x.reshape(S_pad * Bp, E)

    # PyTorch layout (4H, in) -> transposed (in, 4H) so the gate dim sits on 128 lanes.
    wih0 = jnp.asarray(params["w_ih_l0"].T, compute_dtype)                       # (E, 4H)
    whh0 = jnp.asarray(params["w_hh_l0"].T, compute_dtype)                       # (H, 4H)
    b0 = jnp.asarray((params["b_ih_l0"] + params["b_hh_l0"])[None, :], jnp.float32)
    # Layer 1: stack [Wih1 ; Whh1] so the per-step recurrence is one (Bp,2H)@(2H,4H) dot.
    w1 = jnp.concatenate(
        [params["w_ih_l1"].T, params["w_hh_l1"].T], axis=0).astype(compute_dtype)  # (2H, 4H)
    b1 = jnp.asarray((params["b_ih_l1"] + params["b_hh_l1"])[None, :], jnp.float32)

    # fc weights padded to 128 output lanes (padded columns zero, sliced off later).
    wfc = jnp.zeros((H, OUTp), jnp.float32).at[:, :OUT].set(
        jnp.asarray(params["w_fc"].T, jnp.float32))
    bfc = jnp.zeros((1, OUTp), jnp.float32).at[:, :OUT].set(
        jnp.asarray(params["b_fc"][None, :], jnp.float32))

    kernel = functools.partial(
        _fused_rnn_kernel, seq_len=S, chunk_len=Tc, batch_pad=Bp, hidden_dim=H,
        needs_mask=needs_mask, unroll=unroll)

    def _full_spec(shape):
        return pl.BlockSpec(shape, lambda t: (0,) * len(shape))

    flops = (2 * S_pad * Bp * (E * 4 * H + H * 4 * H + 2 * H * 4 * H)
             + 2 * Bp * H * OUTp)
    transcendentals = S_pad * Bp * 18 * H
    bytes_accessed = int(
        x_flat.size * x_flat.dtype.itemsize
        + sum(int(a.size) * a.dtype.itemsize
              for a in (wih0, whh0, b0, w1, b1, wfc, bfc))
        + Bp * OUTp * 4)

    out_pad = pl.pallas_call(
        kernel,
        out_shape=jax.ShapeDtypeStruct((Bp, OUTp), jnp.float32),
        grid_spec=pltpu.PrefetchScalarGridSpec(
            num_scalar_prefetch=0,
            grid=(n_chunks,),
            in_specs=[
                pl.BlockSpec((Tc * Bp, E), lambda t: (t, 0)),   # streamed input chunk
                _full_spec(wih0.shape),
                _full_spec(whh0.shape),
                _full_spec(b0.shape),
                _full_spec(w1.shape),
                _full_spec(b1.shape),
                _full_spec(wfc.shape),
                _full_spec(bfc.shape),
            ],
            out_specs=pl.BlockSpec((Bp, OUTp), lambda t: (0, 0)),
            scratch_shapes=[
                pltpu.VMEM((Tc * Bp, 4 * H), jnp.float32),   # per-chunk input projection
                pltpu.VMEM((Bp, H), jnp.float32),            # h0
                pltpu.VMEM((Bp, H), jnp.float32),            # c0
                pltpu.VMEM((Bp, H), jnp.float32),            # h1
                pltpu.VMEM((Bp, H), jnp.float32),            # c1
            ]),
        compiler_params=pltpu.CompilerParams(
            dimension_semantics=("arbitrary",),
            vmem_limit_bytes=32 * 1024 * 1024),
        cost_estimate=pl.CostEstimate(flops=flops,
                                      transcendentals=transcendentals,
                                      bytes_accessed=bytes_accessed),
    )(x_flat, wih0, whh0, b0, w1, b1, wfc, bfc)

    # fc(output[-1, :, :]).view(-1)
    return out_pad[:B, :OUT].reshape(-1)


# ---------------------------------------------------------------------------
# Pure-JAX f32 reference (for correctness check)
# ---------------------------------------------------------------------------
def _ref_lstm_layer(x_seq, w_ih, w_hh, b_ih, b_hh):
    S, B, _ = x_seq.shape
    H = w_hh.shape[1]

    def step(carry, x_t):
        h, c = carry
        gates = x_t @ w_ih.T + h @ w_hh.T + b_ih + b_hh
        i = jax.nn.sigmoid(gates[:, 0 * H:1 * H])
        f = jax.nn.sigmoid(gates[:, 1 * H:2 * H])
        g = jnp.tanh(gates[:, 2 * H:3 * H])
        o = jax.nn.sigmoid(gates[:, 3 * H:4 * H])
        c = f * c + i * g
        h = o * jnp.tanh(c)
        return (h, c), h

    init = (jnp.zeros((B, H), jnp.float32), jnp.zeros((B, H), jnp.float32))
    _, hs = jax.lax.scan(step, init, x_seq)
    return hs


def _ref_forward(text, params):
    emb = jnp.take(params["embedding"], text, axis=0)
    h1 = _ref_lstm_layer(emb, params["w_ih_l0"], params["w_hh_l0"],
                         params["b_ih_l0"], params["b_hh_l0"])
    h2 = _ref_lstm_layer(h1, params["w_ih_l1"], params["w_hh_l1"],
                         params["b_ih_l1"], params["b_hh_l1"])
    return (h2[-1] @ params["w_fc"].T + params["b_fc"]).reshape(-1)


# ---------------------------------------------------------------------------
def init_params(key, vocab_size, embedding_dim, hidden_dim, output_dim):
    keys = jax.random.split(key, 12)
    k = 1.0 / jnp.sqrt(hidden_dim)

    def unif(rk, shape):
        return jax.random.uniform(rk, shape, jnp.float32, minval=-k, maxval=k)

    return {
        "embedding": jax.random.normal(keys[0], (vocab_size, embedding_dim),
                                       jnp.float32),
        # layer 0
        "w_ih_l0": unif(keys[1], (4 * hidden_dim, embedding_dim)),
        "w_hh_l0": unif(keys[2], (4 * hidden_dim, hidden_dim)),
        "b_ih_l0": unif(keys[3], (4 * hidden_dim,)),
        "b_hh_l0": unif(keys[4], (4 * hidden_dim,)),
        # layer 1
        "w_ih_l1": unif(keys[5], (4 * hidden_dim, hidden_dim)),
        "w_hh_l1": unif(keys[6], (4 * hidden_dim, hidden_dim)),
        "b_ih_l1": unif(keys[7], (4 * hidden_dim,)),
        "b_hh_l1": unif(keys[8], (4 * hidden_dim,)),
        # fc
        "w_fc": unif(keys[9], (output_dim, hidden_dim)),
        "b_fc": unif(keys[10], (output_dim,)),
    }


if __name__ == "__main__":
    VOCAB = 100
    EMB = 32
    HID = 32
    OUT = 1
    SEQ = 8
    BATCH = 4

    key = jax.random.PRNGKey(0)
    pkey, tkey = jax.random.split(key)
    params = init_params(pkey, VOCAB, EMB, HID, OUT)

    # text: (seq_len, batch) int32 token indices
    text = jax.random.randint(tkey, (SEQ, BATCH), 0, VOCAB, dtype=jnp.int32)

    # chunk_timesteps=4 -> 2-step grid, exercising the streamed/chunked recurrence path.
    out = rnn_forward(text, params, chunk_timesteps=4)
    out = jax.block_until_ready(out)

    ref = _ref_forward(text, params)
    assert out.shape == (BATCH * OUT,)
    # bf16 matmul operands (f32 accumulation/state) vs the pure-f32 reference.
    assert jnp.allclose(out, ref, atol=2e-2, rtol=2e-2), (out, ref)

    print("KERNEL_OK")
</pallas_src>

<mosaic_0001>
module attributes {stable_mosaic.version = 11 : i64} {
  func.func @_fused_rnn_kernel(%arg0: i32, %arg1: memref<32x32xbf16, #tpu.memory_space<vmem>>, %arg2: memref<32x128xbf16, #tpu.memory_space<vmem>>, %arg3: memref<32x128xbf16, #tpu.memory_space<vmem>>, %arg4: memref<1x128xf32, #tpu.memory_space<vmem>>, %arg5: memref<64x128xbf16, #tpu.memory_space<vmem>>, %arg6: memref<1x128xf32, #tpu.memory_space<vmem>>, %arg7: memref<32x128xf32, #tpu.memory_space<vmem>>, %arg8: memref<1x128xf32, #tpu.memory_space<vmem>>, %arg9: memref<8x128xf32, #tpu.memory_space<vmem>>, %arg10: memref<32x128xf32, #tpu.memory_space<vmem>>, %arg11: memref<8x32xf32, #tpu.memory_space<vmem>>, %arg12: memref<8x32xf32, #tpu.memory_space<vmem>>, %arg13: memref<8x32xf32, #tpu.memory_space<vmem>>, %arg14: memref<8x32xf32, #tpu.memory_space<vmem>>) attributes {dimension_semantics = [#tpu.dimension_semantics<arbitrary>], iteration_bounds = array<i64: 2>, scalar_prefetch = 0 : i64, scratch_operands = 5 : i64, tpu.core_type = #tpu.core_type<tc>, window_params = [{transform_indices = @transform_0, window_bounds = array<i64: 32, 32>}, {pipeline_mode = #tpu.pipeline_mode<synchronous>, transform_indices = @transform_1, window_bounds = array<i64: 32, 128>}, {pipeline_mode = #tpu.pipeline_mode<synchronous>, transform_indices = @transform_2, window_bounds = array<i64: 32, 128>}, {pipeline_mode = #tpu.pipeline_mode<synchronous>, transform_indices = @transform_3, window_bounds = array<i64: 1, 128>}, {pipeline_mode = #tpu.pipeline_mode<synchronous>, transform_indices = @transform_4, window_bounds = array<i64: 64, 128>}, {pipeline_mode = #tpu.pipeline_mode<synchronous>, transform_indices = @transform_5, window_bounds = array<i64: 1, 128>}, {pipeline_mode = #tpu.pipeline_mode<synchronous>, transform_indices = @transform_6, window_bounds = array<i64: 32, 128>}, {pipeline_mode = #tpu.pipeline_mode<synchronous>, transform_indices = @transform_7, window_bounds = array<i64: 1, 128>}, {pipeline_mode = #tpu.pipeline_mode<synchronous>, transform_indices = @transform_8, window_bounds = array<i64: 8, 128>}]} {
    %c0_i32 = arith.constant 0 : i32
    %0 = arith.cmpi eq, %arg0, %c0_i32 : i32
    %1 = arith.extui %0 : i1 to i32
    %c0_i32_0 = arith.constant 0 : i32
    %2 = arith.cmpi ne, %1, %c0_i32_0 : i32
    scf.if %2 {
      %cst_56 = arith.constant 0.000000e+00 : f32
      %192 = vector.broadcast %cst_56 : f32 to vector<8x32xf32>
      %c0_57 = arith.constant 0 : index
      %c0_58 = arith.constant 0 : index
      %193 = vector.load %arg11[%c0_57, %c0_58] : memref<8x32xf32, #tpu.memory_space<vmem>>, vector<8x32xf32>
      tpu.vector_store %arg11[%c0_57, %c0_58], %192 {strides = array<i32>} : memref<8x32xf32, #tpu.memory_space<vmem>>, vector<8x32xf32>,
      %c0_59 = arith.constant 0 : index
      %c0_60 = arith.constant 0 : index
      %194 = vector.load %arg12[%c0_59, %c0_60] : memref<8x32xf32, #tpu.memory_space<vmem>>, vector<8x32xf32>
      tpu.vector_store %arg12[%c0_59, %c0_60], %192 {strides = array<i32>} : memref<8x32xf32, #tpu.memory_space<vmem>>, vector<8x32xf32>,
      %c0_61 = arith.constant 0 : index
      %c0_62 = arith.constant 0 : index
      %195 = vector.load %arg13[%c0_61, %c0_62] : memref<8x32xf32, #tpu.memory_space<vmem>>, vector<8x32xf32>
      tpu.vector_store %arg13[%c0_61, %c0_62], %192 {strides = array<i32>} : memref<8x32xf32, #tpu.memory_space<vmem>>, vector<8x32xf32>,
      %c0_63 = arith.constant 0 : index
      %c0_64 = arith.constant 0 : index
      %196 = vector.load %arg14[%c0_63, %c0_64] : memref<8x32xf32, #tpu.memory_space<vmem>>, vector<8x32xf32>
      tpu.vector_store %arg14[%c0_63, %c0_64], %192 {strides = array<i32>} : memref<8x32xf32, #tpu.memory_space<vmem>>, vector<8x32xf32>,
    } else {
    }
    %c0 = arith.constant 0 : index
    %c0_1 = arith.constant 0 : index
    %3 = vector.load %arg1[%c0, %c0_1] : memref<32x32xbf16, #tpu.memory_space<vmem>>, vector<32x32xbf16>
    %c0_2 = arith.constant 0 : index
    %c0_3 = arith.constant 0 : index
    %4 = vector.load %arg2[%c0_2, %c0_3] : memref<32x128xbf16, #tpu.memory_space<vmem>>, vector<32x128xbf16>
    %cst = arith.constant dense<0.000000e+00> : vector<32x128xf32>
    %5 = tpu.matmul %3, %4, %cst {dimension_numbers = #tpu.dot_dimension_numbers<[1], [0], [0], [1], [0, 0, 1, 1], [], []>} : vector<32x32xbf16>, vector<32x128xbf16>, vector<32x128xf32> -> vector<32x128xf32>
    %c0_4 = arith.constant 0 : index
    %c0_5 = arith.constant 0 : index
    %6 = vector.load %arg4[%c0_4, %c0_5] : memref<1x128xf32, #tpu.memory_space<vmem>>, vector<1x128xf32>
    %7 = vector.broadcast %6 : vector<1x128xf32> to vector<32x128xf32>
    %8 = arith.addf %5, %7 : vector<32x128xf32>
    %c0_6 = arith.constant 0 : index
    %c0_7 = arith.constant 0 : index
    %9 = vector.load %arg10[%c0_6, %c0_7] : memref<32x128xf32, #tpu.memory_space<vmem>>, vector<32x128xf32>
    tpu.vector_store %arg10[%c0_6, %c0_7], %8 {strides = array<i32>} : memref<32x128xf32, #tpu.memory_space<vmem>>, vector<32x128xf32>,
    %c0_8 = arith.constant 0 : index
    %c0_9 = arith.constant 0 : index
    %10 = vector.load %arg3[%c0_8, %c0_9] : memref<32x128xbf16, #tpu.memory_space<vmem>>, vector<32x128xbf16>
    %c0_10 = arith.constant 0 : index
    %c0_11 = arith.constant 0 : index
    %11 = vector.load %arg5[%c0_10, %c0_11] : memref<64x128xbf16, #tpu.memory_space<vmem>>, vector<64x128xbf16>
    %c0_12 = arith.constant 0 : index
    %c0_13 = arith.constant 0 : index
    %12 = vector.load %arg6[%c0_12, %c0_13] : memref<1x128xf32, #tpu.memory_space<vmem>>, vector<1x128xf32>
    %c0_14 = arith.constant 0 : index
    %c0_15 = arith.constant 0 : index
    %13 = vector.load %arg11[%c0_14, %c0_15] : memref<8x32xf32, #tpu.memory_space<vmem>>, vector<8x32xf32>
    %c0_16 = arith.constant 0 : index
    %c0_17 = arith.constant 0 : index
    %14 = vector.load %arg12[%c0_16, %c0_17] : memref<8x32xf32, #tpu.memory_space<vmem>>, vector<8x32xf32>
    %c0_18 = arith.constant 0 : index
    %c0_19 = arith.constant 0 : index
    %15 = vector.load %arg13[%c0_18, %c0_19] : memref<8x32xf32, #tpu.memory_space<vmem>>, vector<8x32xf32>
    %c0_20 = arith.constant 0 : index
    %c0_21 = arith.constant 0 : index
    %16 = vector.load %arg14[%c0_20, %c0_21] : memref<8x32xf32, #tpu.memory_space<vmem>>, vector<8x32xf32>
    %c0_i32_22 = arith.constant 0 : i32
    %c8_i32 = arith.constant 8 : i32
    %17 = arith.muli %c0_i32_22, %c8_i32 : i32
    %18 = tpu.assume_multiple %17, 8 : i32
    %19 = arith.index_cast %18 : i32 to index
    %c0_23 = arith.constant 0 : index
    %20 = vector.load %arg10[%19, %c0_23] : memref<32x128xf32, #tpu.memory_space<vmem>>, vector<8x128xf32>
    %21 = arith.truncf %13 : vector<8x32xf32> to vector<8x32xbf16>
    %cst_24 = arith.constant dense<0.000000e+00> : vector<8x128xf32>
    %22 = tpu.matmul %21, %10, %cst_24 {dimension_numbers = #tpu.dot_dimension_numbers<[1], [0], [0], [1], [0, 0, 1, 1], [], []>} : vector<8x32xbf16>, vector<32x128xbf16>, vector<8x128xf32> -> vector<8x128xf32>
    %23 = arith.addf %20, %22 : vector<8x128xf32>
    %24 = arith.negf %23 : vector<8x128xf32>
    %25 = math.exp %24 : vector<8x128xf32>
    %cst_25 = arith.constant 1.000000e+00 : f32
    %26 = vector.broadcast %cst_25 : f32 to vector<8x128xf32>
    %27 = arith.addf %26, %25 : vector<8x128xf32>
    %28 = arith.divf %26, %27 : vector<8x128xf32>
    %29 = math.tanh %23 : vector<8x128xf32>
    %30 = vector.extract_strided_slice %28 {offsets = [0, 0], sizes = [8, 32], strides = [1, 1]} : vector<8x128xf32> to vector<8x32xf32>
    %31 = vector.extract_strided_slice %28 {offsets = [0, 32], sizes = [8, 32], strides = [1, 1]} : vector<8x128xf32> to vector<8x32xf32>
    %32 = vector.extract_strided_slice %28 {offsets = [0, 96], sizes = [8, 32], strides = [1, 1]} : vector<8x128xf32> to vector<8x32xf32>
    %33 = vector.extract_strided_slice %29 {offsets = [0, 64], sizes = [8, 32], strides = [1, 1]} : vector<8x128xf32> to vector<8x32xf32>
    %34 = arith.mulf %31, %14 : vector<8x32xf32>
    %35 = arith.mulf %30, %33 : vector<8x32xf32>
    %36 = arith.addf %34, %35 : vector<8x32xf32>
    %37 = math.tanh %36 : vector<8x32xf32>
    %38 = arith.mulf %32, %37 : vector<8x32xf32>
    %39 = tpu.concatenate %38, %15 in 1 : vector<8x32xf32>, vector<8x32xf32> -> vector<8x64xf32>
    %40 = arith.truncf %39 : vector<8x64xf32> to vector<8x64xbf16>
    %cst_26 = arith.constant dense<0.000000e+00> : vector<8x128xf32>
    %41 = tpu.matmul %40, %11, %cst_26 {dimension_numbers = #tpu.dot_dimension_numbers<[1], [0], [0], [1], [0, 0, 1, 1], [], []>} : vector<8x64xbf16>, vector<64x128xbf16>, vector<8x128xf32> -> vector<8x128xf32>
    %42 = vector.broadcast %12 : vector<1x128xf32> to vector<8x128xf32>
    %43 = arith.addf %41, %42 : vector<8x128xf32>
    %44 = arith.negf %43 : vector<8x128xf32>
    %45 = math.exp %44 : vector<8x128xf32>
    %cst_27 = arith.constant 1.000000e+00 : f32
    %46 = vector.broadcast %cst_27 : f32 to vector<8x128xf32>
    %47 = arith.addf %46, %45 : vector<8x128xf32>
    %48 = arith.divf %46, %47 : vector<8x128xf32>
    %49 = math.tanh %43 : vector<8x128xf32>
    %50 = vector.extract_strided_slice %48 {offsets = [0, 0], sizes = [8, 32], strides = [1, 1]} : vector<8x128xf32> to vector<8x32xf32>
    %51 = vector.extract_strided_slice %48 {offsets = [0, 32], sizes = [8, 32], strides = [1, 1]} : vector<8x128xf32> to vector<8x32xf32>
    %52 = vector.extract_strided_slice %48 {offsets = [0, 96], sizes = [8, 32], strides = [1, 1]} : vector<8x128xf32> to vector<8x32xf32>
    %53 = vector.extract_strided_slice %49 {offsets = [0, 64], sizes = [8, 32], strides = [1, 1]} : vector<8x128xf32> to vector<8x32xf32>
    %54 = arith.mulf %51, %16 : vector<8x32xf32>
    %55 = arith.mulf %50, %53 : vector<8x32xf32>
    %56 = arith.addf %54, %55 : vector<8x32xf32>
    %57 = math.tanh %56 : vector<8x32xf32>
    %58 = arith.mulf %52, %57 : vector<8x32xf32>
    %c1_i32 = arith.constant 1 : i32
    %c8_i32_28 = arith.constant 8 : i32
    %59 = arith.muli %c1_i32, %c8_i32_28 : i32
    %60 = tpu.assume_multiple %59, 8 : i32
    %61 = arith.index_cast %60 : i32 to index
    %c0_29 = arith.constant 0 : index
    %62 = vector.load %arg10[%61, %c0_29] : memref<32x128xf32, #tpu.memory_space<vmem>>, vector<8x128xf32>
    %63 = arith.truncf %38 : vector<8x32xf32> to vector<8x32xbf16>
    %cst_30 = arith.constant dense<0.000000e+00> : vector<8x128xf32>
    %64 = tpu.matmul %63, %10, %cst_30 {dimension_numbers = #tpu.dot_dimension_numbers<[1], [0], [0], [1], [0, 0, 1, 1], [], []>} : vector<8x32xbf16>, vector<32x128xbf16>, vector<8x128xf32> -> vector<8x128xf32>
    %65 = arith.addf %62, %64 : vector<8x128xf32>
    %66 = arith.negf %65 : vector<8x128xf32>
    %67 = math.exp %66 : vector<8x128xf32>
    %cst_31 = arith.constant 1.000000e+00 : f32
    %68 = vector.broadcast %cst_31 : f32 to vector<8x128xf32>
    %69 = arith.addf %68, %67 : vector<8x128xf32>
    %70 = arith.divf %68, %69 : vector<8x128xf32>
    %71 = math.tanh %65 : vector<8x128xf32>
    %72 = vector.extract_strided_slice %70 {offsets = [0, 0], sizes = [8, 32], strides = [1, 1]} : vector<8x128xf32> to vector<8x32xf32>
    %73 = vector.extract_strided_slice %70 {offsets = [0, 32], sizes = [8, 32], strides = [1, 1]} : vector<8x128xf32> to vector<8x32xf32>
    %74 = vector.extract_strided_slice %70 {offsets = [0, 96], sizes = [8, 32], strides = [1, 1]} : vector<8x128xf32> to vector<8x32xf32>
    %75 = vector.extract_strided_slice %71 {offsets = [0, 64], sizes = [8, 32], strides = [1, 1]} : vector<8x128xf32> to vector<8x32xf32>
    %76 = arith.mulf %73, %36 : vector<8x32xf32>
    %77 = arith.mulf %72, %75 : vector<8x32xf32>
    %78 = arith.addf %76, %77 : vector<8x32xf32>
    %79 = math.tanh %78 : vector<8x32xf32>
    %80 = arith.mulf %74, %79 : vector<8x32xf32>
    %81 = tpu.concatenate %80, %58 in 1 : vector<8x32xf32>, vector<8x32xf32> -> vector<8x64xf32>
    %82 = arith.truncf %81 : vector<8x64xf32> to vector<8x64xbf16>
    %cst_32 = arith.constant dense<0.000000e+00> : vector<8x128xf32>
    %83 = tpu.matmul %82, %11, %cst_32 {dimension_numbers = #tpu.dot_dimension_numbers<[1], [0], [0], [1], [0, 0, 1, 1], [], []>} : vector<8x64xbf16>, vector<64x128xbf16>, vector<8x128xf32> -> vector<8x128xf32>
    %84 = vector.broadcast %12 : vector<1x128xf32> to vector<8x128xf32>
    %85 = arith.addf %83, %84 : vector<8x128xf32>
    %86 = arith.negf %85 : vector<8x128xf32>
    %87 = math.exp %86 : vector<8x128xf32>
    %cst_33 = arith.constant 1.000000e+00 : f32
    %88 = vector.broadcast %cst_33 : f32 to vector<8x128xf32>
    %89 = arith.addf %88, %87 : vector<8x128xf32>
    %90 = arith.divf %88, %89 : vector<8x128xf32>
    %91 = math.tanh %85 : vector<8x128xf32>
    %92 = vector.extract_strided_slice %90 {offsets = [0, 0], sizes = [8, 32], strides = [1, 1]} : vector<8x128xf32> to vector<8x32xf32>
    %93 = vector.extract_strided_slice %90 {offsets = [0, 32], sizes = [8, 32], strides = [1, 1]} : vector<8x128xf32> to vector<8x32xf32>
    %94 = vector.extract_strided_slice %90 {offsets = [0, 96], sizes = [8, 32], strides = [1, 1]} : vector<8x128xf32> to vector<8x32xf32>
    %95 = vector.extract_strided_slice %91 {offsets = [0, 64], sizes = [8, 32], strides = [1, 1]} : vector<8x128xf32> to vector<8x32xf32>
    %96 = arith.mulf %93, %56 : vector<8x32xf32>
    %97 = arith.mulf %92, %95 : vector<8x32xf32>
    %98 = arith.addf %96, %97 : vector<8x32xf32>
    %99 = math.tanh %98 : vector<8x32xf32>
    %100 = arith.mulf %94, %99 : vector<8x32xf32>
    %c2_i32 = arith.constant 2 : i32
    %c8_i32_34 = arith.constant 8 : i32
    %101 = arith.muli %c2_i32, %c8_i32_34 : i32
    %102 = tpu.assume_multiple %101, 8 : i32
    %103 = arith.index_cast %102 : i32 to index
    %c0_35 = arith.constant 0 : index
    %104 = vector.load %arg10[%103, %c0_35] : memref<32x128xf32, #tpu.memory_space<vmem>>, vector<8x128xf32>
    %105 = arith.truncf %80 : vector<8x32xf32> to vector<8x32xbf16>
    %cst_36 = arith.constant dense<0.000000e+00> : vector<8x128xf32>
    %106 = tpu.matmul %105, %10, %cst_36 {dimension_numbers = #tpu.dot_dimension_numbers<[1], [0], [0], [1], [0, 0, 1, 1], [], []>} : vector<8x32xbf16>, vector<32x128xbf16>, vector<8x128xf32> -> vector<8x128xf32>
    %107 = arith.addf %104, %106 : vector<8x128xf32>
    %108 = arith.negf %107 : vector<8x128xf32>
    %109 = math.exp %108 : vector<8x128xf32>
    %cst_37 = arith.constant 1.000000e+00 : f32
    %110 = vector.broadcast %cst_37 : f32 to vector<8x128xf32>
    %111 = arith.addf %110, %109 : vector<8x128xf32>
    %112 = arith.divf %110, %111 : vector<8x128xf32>
    %113 = math.tanh %107 : vector<8x128xf32>
    %114 = vector.extract_strided_slice %112 {offsets = [0, 0], sizes = [8, 32], strides = [1, 1]} : vector<8x128xf32> to vector<8x32xf32>
    %115 = vector.extract_strided_slice %112 {offsets = [0, 32], sizes = [8, 32], strides = [1, 1]} : vector<8x128xf32> to vector<8x32xf32>
    %116 = vector.extract_strided_slice %112 {offsets = [0, 96], sizes = [8, 32], strides = [1, 1]} : vector<8x128xf32> to vector<8x32xf32>
    %117 = vector.extract_strided_slice %113 {offsets = [0, 64], sizes = [8, 32], strides = [1, 1]} : vector<8x128xf32> to vector<8x32xf32>
    %118 = arith.mulf %115, %78 : vector<8x32xf32>
    %119 = arith.mulf %114, %117 : vector<8x32xf32>
    %120 = arith.addf %118, %119 : vector<8x32xf32>
    %121 = math.tanh %120 : vector<8x32xf32>
    %122 = arith.mulf %116, %121 : vector<8x32xf32>
    %123 = tpu.concatenate %122, %100 in 1 : vector<8x32xf32>, vector<8x32xf32> -> vector<8x64xf32>
    %124 = arith.truncf %123 : vector<8x64xf32> to vector<8x64xbf16>
    %cst_38 = arith.constant dense<0.000000e+00> : vector<8x128xf32>
    %125 = tpu.matmul %124, %11, %cst_38 {dimension_numbers = #tpu.dot_dimension_numbers<[1], [0], [0], [1], [0, 0, 1, 1], [], []>} : vector<8x64xbf16>, vector<64x128xbf16>, vector<8x128xf32> -> vector<8x128xf32>
    %126 = vector.broadcast %12 : vector<1x128xf32> to vector<8x128xf32>
    %127 = arith.addf %125, %126 : vector<8x128xf32>
    %128 = arith.negf %127 : vector<8x128xf32>
    %129 = math.exp %128 : vector<8x128xf32>
    %cst_39 = arith.constant 1.000000e+00 : f32
    %130 = vector.broadcast %cst_39 : f32 to vector<8x128xf32>
    %131 = arith.addf %130, %129 : vector<8x128xf32>
    %132 = arith.divf %130, %131 : vector<8x128xf32>
    %133 = math.tanh %127 : vector<8x128xf32>
    %134 = vector.extract_strided_slice %132 {offsets = [0, 0], sizes = [8, 32], strides = [1, 1]} : vector<8x128xf32> to vector<8x32xf32>
    %135 = vector.extract_strided_slice %132 {offsets = [0, 32], sizes = [8, 32], strides = [1, 1]} : vector<8x128xf32> to vector<8x32xf32>
    %136 = vector.extract_strided_slice %132 {offsets = [0, 96], sizes = [8, 32], strides = [1, 1]} : vector<8x128xf32> to vector<8x32xf32>
    %137 = vector.extract_strided_slice %133 {offsets = [0, 64], sizes = [8, 32], strides = [1, 1]} : vector<8x128xf32> to vector<8x32xf32>
    %138 = arith.mulf %135, %98 : vector<8x32xf32>
    %139 = arith.mulf %134, %137 : vector<8x32xf32>
    %140 = arith.addf %138, %139 : vector<8x32xf32>
    %141 = math.tanh %140 : vector<8x32xf32>
    %142 = arith.mulf %136, %141 : vector<8x32xf32>
    %c3_i32 = arith.constant 3 : i32
    %c8_i32_40 = arith.constant 8 : i32
    %143 = arith.muli %c3_i32, %c8_i32_40 : i32
    %144 = tpu.assume_multiple %143, 8 : i32
    %145 = arith.index_cast %144 : i32 to index
    %c0_41 = arith.constant 0 : index
    %146 = vector.load %arg10[%145, %c0_41] : memref<32x128xf32, #tpu.memory_space<vmem>>, vector<8x128xf32>
    %147 = arith.truncf %122 : vector<8x32xf32> to vector<8x32xbf16>
    %cst_42 = arith.constant dense<0.000000e+00> : vector<8x128xf32>
    %148 = tpu.matmul %147, %10, %cst_42 {dimension_numbers = #tpu.dot_dimension_numbers<[1], [0], [0], [1], [0, 0, 1, 1], [], []>} : vector<8x32xbf16>, vector<32x128xbf16>, vector<8x128xf32> -> vector<8x128xf32>
    %149 = arith.addf %146, %148 : vector<8x128xf32>
    %150 = arith.negf %149 : vector<8x128xf32>
    %151 = math.exp %150 : vector<8x128xf32>
    %cst_43 = arith.constant 1.000000e+00 : f32
    %152 = vector.broadcast %cst_43 : f32 to vector<8x128xf32>
    %153 = arith.addf %152, %151 : vector<8x128xf32>
    %154 = arith.divf %152, %153 : vector<8x128xf32>
    %155 = math.tanh %149 : vector<8x128xf32>
    %156 = vector.extract_strided_slice %154 {offsets = [0, 0], sizes = [8, 32], strides = [1, 1]} : vector<8x128xf32> to vector<8x32xf32>
    %157 = vector.extract_strided_slice %154 {offsets = [0, 32], sizes = [8, 32], strides = [1, 1]} : vector<8x128xf32> to vector<8x32xf32>
    %158 = vector.extract_strided_slice %154 {offsets = [0, 96], sizes = [8, 32], strides = [1, 1]} : vector<8x128xf32> to vector<8x32xf32>
    %159 = vector.extract_strided_slice %155 {offsets = [0, 64], sizes = [8, 32], strides = [1, 1]} : vector<8x128xf32> to vector<8x32xf32>
    %160 = arith.mulf %157, %120 : vector<8x32xf32>
    %161 = arith.mulf %156, %159 : vector<8x32xf32>
    %162 = arith.addf %160, %161 : vector<8x32xf32>
    %163 = math.tanh %162 : vector<8x32xf32>
    %164 = arith.mulf %158, %163 : vector<8x32xf32>
    %165 = tpu.concatenate %164, %142 in 1 : vector<8x32xf32>, vector<8x32xf32> -> vector<8x64xf32>
    %166 = arith.truncf %165 : vector<8x64xf32> to vector<8x64xbf16>
    %cst_44 = arith.constant dense<0.000000e+00> : vector<8x128xf32>
    %167 = tpu.matmul %166, %11, %cst_44 {dimension_numbers = #tpu.dot_dimension_numbers<[1], [0], [0], [1], [0, 0, 1, 1], [], []>} : vector<8x64xbf16>, vector<64x128xbf16>, vector<8x128xf32> -> vector<8x128xf32>
    %168 = vector.broadcast %12 : vector<1x128xf32> to vector<8x128xf32>
    %169 = arith.addf %167, %168 : vector<8x128xf32>
    %170 = arith.negf %169 : vector<8x128xf32>
    %171 = math.exp %170 : vector<8x128xf32>
    %cst_45 = arith.constant 1.000000e+00 : f32
    %172 = vector.broadcast %cst_45 : f32 to vector<8x128xf32>
    %173 = arith.addf %172, %171 : vector<8x128xf32>
    %174 = arith.divf %172, %173 : vector<8x128xf32>
    %175 = math.tanh %169 : vector<8x128xf32>
    %176 = vector.extract_strided_slice %174 {offsets = [0, 0], sizes = [8, 32], strides = [1, 1]} : vector<8x128xf32> to vector<8x32xf32>
    %177 = vector.extract_strided_slice %174 {offsets = [0, 32], sizes = [8, 32], strides = [1, 1]} : vector<8x128xf32> to vector<8x32xf32>
    %178 = vector.extract_strided_slice %174 {offsets = [0, 96], sizes = [8, 32], strides = [1, 1]} : vector<8x128xf32> to vector<8x32xf32>
    %179 = vector.extract_strided_slice %175 {offsets = [0, 64], sizes = [8, 32], strides = [1, 1]} : vector<8x128xf32> to vector<8x32xf32>
    %180 = arith.mulf %177, %140 : vector<8x32xf32>
    %181 = arith.mulf %176, %179 : vector<8x32xf32>
    %182 = arith.addf %180, %181 : vector<8x32xf32>
    %183 = math.tanh %182 : vector<8x32xf32>
    %184 = arith.mulf %178, %183 : vector<8x32xf32>
    %c4_i32 = arith.constant 4 : i32
    %c0_46 = arith.constant 0 : index
    %c0_47 = arith.constant 0 : index
    %185 = vector.load %arg11[%c0_46, %c0_47] : memref<8x32xf32, #tpu.memory_space<vmem>>, vector<8x32xf32>
    tpu.vector_store %arg11[%c0_46, %c0_47], %164 {strides = array<i32>} : memref<8x32xf32, #tpu.memory_space<vmem>>, vector<8x32xf32>,
    %c0_48 = arith.constant 0 : index
    %c0_49 = arith.constant 0 : index
    %186 = vector.load %arg12[%c0_48, %c0_49] : memref<8x32xf32, #tpu.memory_space<vmem>>, vector<8x32xf32>
    tpu.vector_store %arg12[%c0_48, %c0_49], %162 {strides = array<i32>} : memref<8x32xf32, #tpu.memory_space<vmem>>, vector<8x32xf32>,
    %c0_50 = arith.constant 0 : index
    %c0_51 = arith.constant 0 : index
    %187 = vector.load %arg13[%c0_50, %c0_51] : memref<8x32xf32, #tpu.memory_space<vmem>>, vector<8x32xf32>
    tpu.vector_store %arg13[%c0_50, %c0_51], %184 {strides = array<i32>} : memref<8x32xf32, #tpu.memory_space<vmem>>, vector<8x32xf32>,
    %c0_52 = arith.constant 0 : index
    %c0_53 = arith.constant 0 : index
    %188 = vector.load %arg14[%c0_52, %c0_53] : memref<8x32xf32, #tpu.memory_space<vmem>>, vector<8x32xf32>
    tpu.vector_store %arg14[%c0_52, %c0_53], %182 {strides = array<i32>} : memref<8x32xf32, #tpu.memory_space<vmem>>, vector<8x32xf32>,
    %c1_i32_54 = arith.constant 1 : i32
    %189 = arith.cmpi eq, %arg0, %c1_i32_54 : i32
    %190 = arith.extui %189 : i1 to i32
    %c0_i32_55 = arith.constant 0 : i32
    %191 = arith.cmpi ne, %190, %c0_i32_55 : i32
    scf.if %191 {
      %c0_56 = arith.constant 0 : index
      %c0_57 = arith.constant 0 : index
      %192 = vector.load %arg7[%c0_56, %c0_57] : memref<32x128xf32, #tpu.memory_space<vmem>>, vector<32x128xf32>
      %cst_58 = arith.constant dense<0.000000e+00> : vector<8x128xf32>
      %193 = tpu.matmul %184, %192, %cst_58 {dimension_numbers = #tpu.dot_dimension_numbers<[1], [0], [0], [1], [0, 0, 1, 1], [], []>} : vector<8x32xf32>, vector<32x128xf32>, vector<8x128xf32> -> vector<8x128xf32>
      %c0_59 = arith.constant 0 : index
      %c0_60 = arith.constant 0 : index
      %194 = vector.load %arg8[%c0_59, %c0_60] : memref<1x128xf32, #tpu.memory_space<vmem>>, vector<1x128xf32>
      %195 = vector.broadcast %194 : vector<1x128xf32> to vector<8x128xf32>
      %196 = arith.addf %193, %195 : vector<8x128xf32>
      %c0_61 = arith.constant 0 : index
      %c0_62 = arith.constant 0 : index
      %197 = vector.load %arg9[%c0_61, %c0_62] : memref<8x128xf32, #tpu.memory_space<vmem>>, vector<8x128xf32>
      tpu.vector_store %arg9[%c0_61, %c0_62], %196 {strides = array<i32>} : memref<8x128xf32, #tpu.memory_space<vmem>>, vector<8x128xf32>,
    } else {
    }
    return
  }
  func.func @transform_0(%arg0: i32) -> (i32, i32) {
    %c0_i32 = arith.constant 0 : i32
    %c0_i32_0 = arith.constant 0 : i32
    return %arg0, %c0_i32 : i32, i32
  }
  func.func @transform_1(%arg0: i32) -> (i32, i32) {
    %c0_i32 = arith.constant 0 : i32
    %c0_i32_0 = arith.constant 0 : i32
    %c0_i32_1 = arith.constant 0 : i32
    return %c0_i32, %c0_i32_0 : i32, i32
  }
  func.func @transform_2(%arg0: i32) -> (i32, i32) {
    %c0_i32 = arith.constant 0 : i32
    %c0_i32_0 = arith.constant 0 : i32
    %c0_i32_1 = arith.constant 0 : i32
    return %c0_i32, %c0_i32_0 : i32, i32
  }
  func.func @transform_3(%arg0: i32) -> (i32, i32) {
    %c0_i32 = arith.constant 0 : i32
    %c0_i32_0 = arith.constant 0 : i32
    %c0_i32_1 = arith.constant 0 : i32
    return %c0_i32, %c0_i32_0 : i32, i32
  }
  func.func @transform_4(%arg0: i32) -> (i32, i32) {
    %c0_i32 = arith.constant 0 : i32
    %c0_i32_0 = arith.constant 0 : i32
    %c0_i32_1 = arith.constant 0 : i32
    return %c0_i32, %c0_i32_0 : i32, i32
  }
  func.func @transform_5(%arg0: i32) -> (i32, i32) {
    %c0_i32 = arith.constant 0 : i32
    %c0_i32_0 = arith.constant 0 : i32
    %c0_i32_1 = arith.constant 0 : i32
    return %c0_i32, %c0_i32_0 : i32, i32
  }
  func.func @transform_6(%arg0: i32) -> (i32, i32) {
    %c0_i32 = arith.constant 0 : i32
    %c0_i32_0 = arith.constant 0 : i32
    %c0_i32_1 = arith.constant 0 : i32
    return %c0_i32, %c0_i32_0 : i32, i32
  }
  func.func @transform_7(%arg0: i32) -> (i32, i32) {
    %c0_i32 = arith.constant 0 : i32
    %c0_i32_0 = arith.constant 0 : i32
    %c0_i32_1 = arith.constant 0 : i32
    return %c0_i32, %c0_i32_0 : i32, i32
  }
  func.func @transform_8(%arg0: i32) -> (i32, i32) {
    %c0_i32 = arith.constant 0 : i32
    %c0_i32_0 = arith.constant 0 : i32
    %c0_i32_1 = arith.constant 0 : i32
    return %c0_i32, %c0_i32_0 : i32, i32
  }
}

</mosaic_0001>

<llo_original>
// kernel: tpu_custom_call.1
$region0: #{tpu_custom_call.1}
  #allocation0 [shape = 'u32[]', space=smem, size = 0x4, offset = 0x4, fixed_abs, tag = 'smem constant byte address 0x4 - core index']
  #allocation1 [shape = 'u32[72,128]{1,0:T(1,128)}', space=vmem, size = 0x9000, scoped, tag = 'internal scratch']
  #allocation2 [shape = 'f32[32,128]{1,0:T(8,128)}', space=vmem, size = 0x4000, scoped, tag = 'scratch operand']
  #allocation3 [shape = 'f32[8,32]{1,0:T(8,128)}', space=vmem, size = 0x1000, scoped, tag = 'scratch operand']
  #allocation4 [shape = 'f32[8,32]{1,0:T(8,128)}', space=vmem, size = 0x1000, scoped, tag = 'scratch operand']
  #allocation5 [shape = 'f32[8,32]{1,0:T(8,128)}', space=vmem, size = 0x1000, scoped, tag = 'scratch operand']
  #allocation6 [shape = 'f32[8,32]{1,0:T(8,128)}', space=vmem, size = 0x1000, scoped, tag = 'scratch operand']
  %s0 = inlined_call_operand.vmem [shape: bf16[64,32], index: 0, kind: input, shape index: {}]
  %s1 = inlined_call_operand.vmem [shape: bf16[32,128], index: 1, kind: input, shape index: {}]
  %s2 = inlined_call_operand.hbm [shape: bf16[32,128], index: 2, kind: input, shape index: {}]
  %s3 = inlined_call_operand.vmem [shape: f32[1,128], index: 3, kind: input, shape index: {}]
  %s4 = inlined_call_operand.vmem [shape: bf16[64,128], index: 4, kind: input, shape index: {}]
  %s5 = inlined_call_operand.vmem [shape: f32[1,128], index: 5, kind: input, shape index: {}]
  %s6 = inlined_call_operand.hbm [shape: f32[32,128], index: 6, kind: input, shape index: {}]
  %s7 = inlined_call_operand.vmem [shape: f32[1,128], index: 7, kind: input, shape index: {}]
  %s8 = inlined_call_operand.hbm [shape: f32[8,128], index: 8, kind: output, shape index: {}]
  %s9 = sld [smem:[#allocation0]]
  $region81: #{tpu_custom_call.1} parent=0
    _
  %s11 = ssub.s32 1, %s9
  %s12 = scalar_select 0, %s11, %s9
  $region1: #{tpu_custom_call.1} parent=0
    #allocation7 [shape = 'u8[8192]{0}', space=vmem, size = 0x2000, scoped, tag = 'input window, operand 2, single buffered']
    #allocation8 [shape = 's32[2]{0}', space=sflag, size = 0x8, scoped, tag = 'scoped memory for tpu_custom_call.1']
    #allocation9 [shape = 's32[2]{0}', space=sflag, size = 0x8, scoped, tag = 'scoped memory for tpu_custom_call.1']
    #allocation10 [shape = 'u8[16384]{0}', space=vmem, size = 0x4000, scoped, tag = 'input window, operand 6, single buffered']
    #allocation11 [shape = 's32[1]{0}', space=sflag, size = 0x4, scoped, tag = 'scoped memory for tpu_custom_call.1']
    #allocation12 [shape = 'u8[4096]{0}', space=vmem, size = 0x1000, scoped, tag = 'output window, operand 0, single buffered']
    %13 = vsyncpa [#allocation8], 0
    %14 = vsyncpa [#allocation11], 0
    %15 = vsyncpa [#allocation9], 0
    loop: start=0, step=1, limit=4
    $region2: #{tpu_custom_call.1} parent=1 // loop_pre_header
      _
    $region3: #{tpu_custom_call.1} parent=1 // loop_header
      %s17 = sphi 0, %s21
      %p18 = scmp.ge.s32.totalorder %s17, 4
      %s27 = sphi 0, %s29
      %s30 = sphi 0, %s27
      %s31 = sphi 0, %s30
      %s47 = sphi 0, %s31
      %s51 = sphi 0, %s51
      %s53 = sphi 0, %s51
      %s54 = sphi 0, %s53
      %s68 = sphi 0, %s54
      %s72 = sphi 0, %s72
      %s74 = sphi 0, %s72
      %s75 = sphi 0, %s74
      %s89 = sphi 0, %s75
      %s93 = sphi 0, %s93
      %s95 = sphi 0, %s93
      %s96 = sphi 0, %s95
      %s110 = sphi 0, %s96
      %s114 = sphi 0, %s114
      %s116 = sphi 0, %s114
      %s117 = sphi 0, %s116
      %s131 = sphi 0, %s117
      %s135 = sphi 0, %s135
      %s137 = sphi 0, %s135
      %s138 = sphi 0, %s137
      %s152 = sphi 0, %s138
      %s156 = sphi 0, %s156
      %s158 = sphi 0, %s156
      %s159 = sphi 0, %s158
      %s173 = sphi 0, %s159
      %s177 = sphi 0, %s177
      %s179 = sphi 0, %s177
      %s180 = sphi 0, %s179
      %s194 = sphi 0, %s180
      %s198 = sphi 0, %s198
      %s200 = sphi 0, %s198
      %s201 = sphi 0, %s200
      %s215 = sphi 0, %s201
    $region4: #{tpu_custom_call.1} parent=1 // loop_header_branch
      %20 = sbr.rel (%p18) target = $region8
    $region5: #{tpu_custom_call.1} parent=1 // loop_body
      %s22 = ssub.s32 %s17, 1
      %s23 = ssub.s32 %s17, 2
      %s24 = sadd.s32 %s17, 1
      %s25 = ssub.s32 %s17, %s24
      %p26 = scmp.eq.s32.totalorder %s25, 0
      %s28 = sadd.s32 %s27, 1
      %s29 = scalar_select %p26, %s27, %s28
      %p32 = pneg %p26
      %p33 = scmp.eq.s32.totalorder %s17, 1
      %p34 = por %p32, %p33
      %p35 = scmp.ne.s32.totalorder %s27, %s30
      %p36 = scmp.eq.s32.totalorder %s17, 0
      %p37 = por %p35, %p36
      %p38 = scmp.ne.s32.totalorder %s27, %s30
      %p39 = scmp.eq.s32.totalorder %s22, 1
      %p40 = por %p38, %p39
      %p41 = scmp.ne.s32.totalorder %s30, %s31
      %p42 = scmp.eq.s32.totalorder %s22, 0
      %p43 = por %p41, %p42
      %p44 = scmp.ne.s32.totalorder %s30, %s31
      %p45 = scmp.eq.s32.totalorder %s23, 1
      %p46 = por %p44, %p45
      %p48 = scmp.ne.s32.totalorder %s31, %s47
      %p49 = scmp.eq.s32.totalorder %s23, 0
      %p50 = por %p48, %p49
      %s52 = sadd.s32 %s51, 1
      %p55 = scmp.eq.s32.totalorder %s17, 1
      %p56 = scmp.ne.s32.totalorder %s51, %s53
      %p57 = scmp.eq.s32.totalorder %s17, 0
      %p58 = por %p56, %p57
      %p59 = scmp.ne.s32.totalorder %s51, %s53
      %p60 = scmp.eq.s32.totalorder %s22, 1
      %p61 = por %p59, %p60
      %p62 = scmp.ne.s32.totalorder %s53, %s54
      %p63 = scmp.eq.s32.totalorder %s22, 0
      %p64 = por %p62, %p63
      %p65 = scmp.ne.s32.totalorder %s53, %s54
      %p66 = scmp.eq.s32.totalorder %s23, 1
      %p67 = por %p65, %p66
      %p69 = scmp.ne.s32.totalorder %s54, %s68
      %p70 = scmp.eq.s32.totalorder %s23, 0
      %p71 = por %p69, %p70
      %s73 = sadd.s32 %s72, 1
      %p76 = scmp.eq.s32.totalorder %s17, 1
      %p77 = scmp.ne.s32.totalorder %s72, %s74
      %p78 = scmp.eq.s32.totalorder %s17, 0
      %p79 = por %p77, %p78
      %p80 = scmp.ne.s32.totalorder %s72, %s74
      %p81 = scmp.eq.s32.totalorder %s22, 1
      %p82 = por %p80, %p81
      %p83 = scmp.ne.s32.totalorder %s74, %s75
      %p84 = scmp.eq.s32.totalorder %s22, 0
      %p85 = por %p83, %p84
      %p86 = scmp.ne.s32.totalorder %s74, %s75
      %p87 = scmp.eq.s32.totalorder %s23, 1
      %p88 = por %p86, %p87
      %p90 = scmp.ne.s32.totalorder %s75, %s89
      %p91 = scmp.eq.s32.totalorder %s23, 0
      %p92 = por %p90, %p91
      %s94 = sadd.s32 %s93, 1
      %p97 = scmp.eq.s32.totalorder %s17, 1
      %p98 = scmp.ne.s32.totalorder %s93, %s95
      %p99 = scmp.eq.s32.totalorder %s17, 0
      %p100 = por %p98, %p99
      %p101 = scmp.ne.s32.totalorder %s93, %s95
      %p102 = scmp.eq.s32.totalorder %s22, 1
      %p103 = por %p101, %p102
      %p104 = scmp.ne.s32.totalorder %s95, %s96
      %p105 = scmp.eq.s32.totalorder %s22, 0
      %p106 = por %p104, %p105
      %p107 = scmp.ne.s32.totalorder %s95, %s96
      %p108 = scmp.eq.s32.totalorder %s23, 1
      %p109 = por %p107, %p108
      %p111 = scmp.ne.s32.totalorder %s96, %s110
      %p112 = scmp.eq.s32.totalorder %s23, 0
      %p113 = por %p111, %p112
      %s115 = sadd.s32 %s114, 1
      %p118 = scmp.eq.s32.totalorder %s17, 1
      %p119 = scmp.ne.s32.totalorder %s114, %s116
      %p120 = scmp.eq.s32.totalorder %s17, 0
      %p121 = por %p119, %p120
      %p122 = scmp.ne.s32.totalorder %s114, %s116
      %p123 = scmp.eq.s32.totalorder %s22, 1
      %p124 = por %p122, %p123
      %p125 = scmp.ne.s32.totalorder %s116, %s117
      %p126 = scmp.eq.s32.totalorder %s22, 0
      %p127 = por %p125, %p126
      %p128 = scmp.ne.s32.totalorder %s116, %s117
      %p129 = scmp.eq.s32.totalorder %s23, 1
      %p130 = por %p128, %p129
      %p132 = scmp.ne.s32.totalorder %s117, %s131
      %p133 = scmp.eq.s32.totalorder %s23, 0
      %p134 = por %p132, %p133
      %s136 = sadd.s32 %s135, 1
      %p139 = scmp.eq.s32.totalorder %s17, 1
      %p140 = scmp.ne.s32.totalorder %s135, %s137
      %p141 = scmp.eq.s32.totalorder %s17, 0
      %p142 = por %p140, %p141
      %p143 = scmp.ne.s32.totalorder %s135, %s137
      %p144 = scmp.eq.s32.totalorder %s22, 1
      %p145 = por %p143, %p144
      %p146 = scmp.ne.s32.totalorder %s137, %s138
      %p147 = scmp.eq.s32.totalorder %s22, 0
      %p148 = por %p146, %p147
      %p149 = scmp.ne.s32.totalorder %s137, %s138
      %p150 = scmp.eq.s32.totalorder %s23, 1
      %p151 = por %p149, %p150
      %p153 = scmp.ne.s32.totalorder %s138, %s152
      %p154 = scmp.eq.s32.totalorder %s23, 0
      %p155 = por %p153, %p154
      %s157 = sadd.s32 %s156, 1
      %p160 = scmp.eq.s32.totalorder %s17, 1
      %p161 = scmp.ne.s32.totalorder %s156, %s158
      %p162 = scmp.eq.s32.totalorder %s17, 0
      %p163 = por %p161, %p162
      %p164 = scmp.ne.s32.totalorder %s156, %s158
      %p165 = scmp.eq.s32.totalorder %s22, 1
      %p166 = por %p164, %p165
      %p167 = scmp.ne.s32.totalorder %s158, %s159
      %p168 = scmp.eq.s32.totalorder %s22, 0
      %p169 = por %p167, %p168
      %p170 = scmp.ne.s32.totalorder %s158, %s159
      %p171 = scmp.eq.s32.totalorder %s23, 1
      %p172 = por %p170, %p171
      %p174 = scmp.ne.s32.totalorder %s159, %s173
      %p175 = scmp.eq.s32.totalorder %s23, 0
      %p176 = por %p174, %p175
      %s178 = sadd.s32 %s177, 1
      %p181 = scmp.eq.s32.totalorder %s17, 1
      %p182 = scmp.ne.s32.totalorder %s177, %s179
      %p183 = scmp.eq.s32.totalorder %s17, 0
      %p184 = por %p182, %p183
      %p185 = scmp.ne.s32.totalorder %s177, %s179
      %p186 = scmp.eq.s32.totalorder %s22, 1
      %p187 = por %p185, %p186
      %p188 = scmp.ne.s32.totalorder %s179, %s180
      %p189 = scmp.eq.s32.totalorder %s22, 0
      %p190 = por %p188, %p189
      %p191 = scmp.ne.s32.totalorder %s179, %s180
      %p192 = scmp.eq.s32.totalorder %s23, 1
      %p193 = por %p191, %p192
      %p195 = scmp.ne.s32.totalorder %s180, %s194
      %p196 = scmp.eq.s32.totalorder %s23, 0
      %p197 = por %p195, %p196
      %s199 = sadd.s32 %s198, 1
      %p202 = scmp.eq.s32.totalorder %s17, 1
      %p203 = scmp.ne.s32.totalorder %s198, %s200
      %p204 = scmp.eq.s32.totalorder %s17, 0
      %p205 = por %p203, %p204
      %p206 = scmp.ne.s32.totalorder %s198, %s200
      %p207 = scmp.eq.s32.totalorder %s22, 1
      %p208 = por %p206, %p207
      %p209 = scmp.ne.s32.totalorder %s200, %s201
      %p210 = scmp.eq.s32.totalorder %s22, 0
      %p211 = por %p209, %p210
      %p212 = scmp.ne.s32.totalorder %s200, %s201
      %p213 = scmp.eq.s32.totalorder %s23, 1
      %p214 = por %p212, %p213
      %p216 = scmp.ne.s32.totalorder %s201, %s215
      %p217 = scmp.eq.s32.totalorder %s23, 0
      %p218 = por %p216, %p217
      %p219 = scmp.le.s32.totalorder 1, %s17
      %p220 = scmp.lt.s32.totalorder %s17, 3
      %p221 = pnand %p219, %p220
      %p222 = pneg %p221
      // Predicated region
      $region9: #{tpu_custom_call.1} parent=5 // pred_check
        _
      $region10: #{tpu_custom_call.1} parent=5 // pred_check_branch
        %224 = sbr.rel (%p221) target = $region12
      $region11: #{tpu_custom_call.1} parent=5 // pred_region
        %s225 = ssub.s32 %s17, 1
        // Predicated region
        $region13: #{tpu_custom_call.1} parent=11 // pred_check
          %p226 = pneg %p64
        $region14: #{tpu_custom_call.1} parent=11 // pred_check_branch
          %228 = sbr.rel (%p226) target = $region16
        $region15: #{tpu_custom_call.1} parent=11 // pred_region
          _
        $region16: #{tpu_custom_call.1} parent=11 // pred_fallthru
          _
        // Predicated region
        $region17: #{tpu_custom_call.1} parent=11 // pred_check
          %p229 = pneg %p85
        $region18: #{tpu_custom_call.1} parent=11 // pred_check_branch
          %231 = sbr.rel (%p229) target = $region20
        $region19: #{tpu_custom_call.1} parent=11 // pred_region
          %233 = vsyncadd [#allocation8], 0
          %s234 = sshll.u32 %s2, 4
          %s235 = int_to_ptr.hbm [resolvable:$true] %s234
          %s236 = sshll.u32 [#allocation7], 4
          %s237 = int_to_ptr.vmem [resolvable:$true] %s236
          %242 = dma.hbm_to_vmem [thread:$0]  %s235, 256, %s237, [#allocation8], 64, 64, 4
        $region20: #{tpu_custom_call.1} parent=11 // pred_fallthru
          _
        // Predicated region
        $region21: #{tpu_custom_call.1} parent=11 // pred_check
          %p243 = pneg %p106
        $region22: #{tpu_custom_call.1} parent=11 // pred_check_branch
          %245 = sbr.rel (%p243) target = $region24
        $region23: #{tpu_custom_call.1} parent=11 // pred_region
          _
        $region24: #{tpu_custom_call.1} parent=11 // pred_fallthru
          _
        // Predicated region
        $region25: #{tpu_custom_call.1} parent=11 // pred_check
          %p246 = pneg %p127
        $region26: #{tpu_custom_call.1} parent=11 // pred_check_branch
          %248 = sbr.rel (%p246) target = $region28
        $region27: #{tpu_custom_call.1} parent=11 // pred_region
          _
        $region28: #{tpu_custom_call.1} parent=11 // pred_fallthru
          _
        // Predicated region
        $region29: #{tpu_custom_call.1} parent=11 // pred_check
          %p249 = pneg %p148
        $region30: #{tpu_custom_call.1} parent=11 // pred_check_branch
          %251 = sbr.rel (%p249) target = $region32
        $region31: #{tpu_custom_call.1} parent=11 // pred_region
          _
        $region32: #{tpu_custom_call.1} parent=11 // pred_fallthru
          _
        // Predicated region
        $region33: #{tpu_custom_call.1} parent=11 // pred_check
          %p252 = pneg %p169
        $region34: #{tpu_custom_call.1} parent=11 // pred_check_branch
          %254 = sbr.rel (%p252) target = $region36
        $region35: #{tpu_custom_call.1} parent=11 // pred_region
          %256 = vsyncadd [#allocation11], 0
          %s257 = sshll.u32 %s6, 4
          %s258 = int_to_ptr.hbm [resolvable:$true] %s257
          %s259 = sshll.u32 [#allocation10], 4
          %s260 = int_to_ptr.vmem [resolvable:$true] %s259
          %265 = dma.hbm_to_vmem [thread:$0]  %s258, 512, %s260, [#allocation11], 128, 128, 8
        $region36: #{tpu_custom_call.1} parent=11 // pred_fallthru
          _
        // Predicated region
        $region37: #{tpu_custom_call.1} parent=11 // pred_check
          %p266 = pneg %p190
        $region38: #{tpu_custom_call.1} parent=11 // pred_check_branch
          %268 = sbr.rel (%p266) target = $region40
        $region39: #{tpu_custom_call.1} parent=11 // pred_region
          _
        $region40: #{tpu_custom_call.1} parent=11 // pred_fallthru
          _
      $region12: #{tpu_custom_call.1} parent=5 // pred_fallthru
        _
      %p269 = scmp.lt.s32.totalorder %s17, 2
      // Predicated region
      $region41: #{tpu_custom_call.1} parent=5 // pred_check
        %p270 = pneg %p269
      $region42: #{tpu_custom_call.1} parent=5 // pred_check_branch
        %272 = sbr.rel (%p270) target = $region44
      $region43: #{tpu_custom_call.1} parent=5 // pred_region
        // Predicated region
        $region45: #{tpu_custom_call.1} parent=43 // pred_check
          %p273 = pneg %p37
        $region46: #{tpu_custom_call.1} parent=43 // pred_check_branch
          %275 = sbr.rel (%p273) target = $region48
        $region47: #{tpu_custom_call.1} parent=43 // pred_region
          %s276 = smul.u32 4, %s17
          %p277 = scmp.lt.s32.totalorder %s276, 7
          %s278 = scalar_select %p277, %s276, 7
          %s279 = smul.addr %s278, 4
          %s280 = scalar_lea.vmem %s0, %s279
          %s281 = smul.u32 4, %s17
        $region48: #{tpu_custom_call.1} parent=43 // pred_fallthru
          _
      $region44: #{tpu_custom_call.1} parent=5 // pred_fallthru
        _
      %p282 = scmp.le.s32.totalorder 1, %s17
      %p283 = scmp.lt.s32.totalorder %s17, 3
      %p284 = pnand %p282, %p283
      %p285 = pneg %p284
      // Predicated region
      $region49: #{tpu_custom_call.1} parent=5 // pred_check
        _
      $region50: #{tpu_custom_call.1} parent=5 // pred_check_branch
        %287 = sbr.rel (%p284) target = $region52
      $region51: #{tpu_custom_call.1} parent=5 // pred_region
        %s288 = ssub.s32 %s17, 1
        // Predicated region
        $region53: #{tpu_custom_call.1} parent=51 // pred_check
          %p289 = pneg %p85
        $region54: #{tpu_custom_call.1} parent=51 // pred_check_branch
          %291 = sbr.rel (%p289) target = $region56
        $region55: #{tpu_custom_call.1} parent=51 // pred_region
          %293 = dma.done [#allocation8], 256
        $region56: #{tpu_custom_call.1} parent=51 // pred_fallthru
          _
        // Predicated region
        $region57: #{tpu_custom_call.1} parent=51 // pred_check
          %p294 = pneg %p169
        $region58: #{tpu_custom_call.1} parent=51 // pred_check_branch
          %296 = sbr.rel (%p294) target = $region60
        $region59: #{tpu_custom_call.1} parent=51 // pred_region
          %298 = dma.done [#allocation11], 512
        $region60: #{tpu_custom_call.1} parent=51 // pred_fallthru
          _
        %s299 = smul.u32 4, %s22
        %p300 = scmp.lt.s32.totalorder %s299, 7
        %s301 = scalar_select %p300, %s299, 7
        %s302 = smul.addr %s301, 4
        %s303 = scalar_lea.vmem %s0, %s302
        %p304 = pneg %p43
        %p305 = pneg %p40
        %p306 = pneg %p64
        %p307 = pneg %p61
        %p308 = pneg %p85
        %p309 = pneg %p82
        %p310 = pneg %p106
        %p311 = pneg %p103
        %p312 = pneg %p127
        %p313 = pneg %p124
        %p314 = pneg %p148
        %p315 = pneg %p145
        %p316 = pneg %p169
        %p317 = pneg %p166
        %p318 = pneg %p190
        %p319 = pneg %p187
        %p320 = pneg %p211
        %p321 = pneg %p208
        %s322 = smul.u32 4, %s22
        %p323 = scmp.lt.s32.totalorder %s322, 7
        %s324 = scalar_select %p323, %s322, 7
        %s325 = smul.addr %s324, 4
        %s326 = scalar_lea.vmem %s0, %s325
        %s327 = smul.u32 4, %s22
        %p329 = scmp.eq.s32.totalorder %s22, 0
        // Predicated region
        $region61: #{tpu_custom_call.1} parent=51 // pred_check
          %p330 = pneg %p329
        $region62: #{tpu_custom_call.1} parent=51 // pred_check_branch
          %332 = sbr.rel (%p330) target = $region64
        $region63: #{tpu_custom_call.1} parent=51 // pred_region
          %vm333 = vcmask 261120
          %334 = vst.msk [vmem:[#allocation3] sm:$0xff] %vm333, 0.0
          %335 = vst.msk [vmem:[#allocation4] sm:$0xff] %vm333, 0.0
          %336 = vst.msk [vmem:[#allocation5] sm:$0xff] %vm333, 0.0
          %337 = vst.msk [vmem:[#allocation6] sm:$0xff] %vm333, 0.0
        $region64: #{tpu_custom_call.1} parent=51 // pred_fallthru
          _
        %v338 = vld [vmem:[%s326] sm:$0xf]
        %v339 = vld [vmem:[%s326 + $0x4] sm:$0xf]
        %v340 = vld [vmem:[%s326 + $0x8] sm:$0xf]
        %v341 = vld [vmem:[%s326 + $0xc] sm:$0xf]
        %v342 = vld [vmem:[%s1] sm:$0xf]
        %v343 = vld [vmem:[%s1 + $0x4] sm:$0xf]
        %v344 = vld [vmem:[%s1 + $0x8] sm:$0xf]
        %v345 = vld [vmem:[%s1 + $0xc] sm:$0xf]
        %v346 = vld [vmem:[%s3] sm:$0x1]
        %v348 = vperm.slane %v346, 0
        %v354 = vunpack.c.l.b16 %v338
        %v355 = vunpack.c.l.b16 %v339
        %v356 = vunpack.c.l.b16 %v340
        %v357 = vunpack.c.l.b16 %v341
        %v358 = vpack.c.b16 %v355, %v354
        %v359 = vpack.c.b16 %v357, %v356
        %v364 = vunpack.c.l.b16 %v342
        %v365 = vunpack.c.l.b16 %v343
        %v366 = vunpack.c.l.b16 %v344
        %v367 = vunpack.c.l.b16 %v345
        %v368 = vpack.c.b16 %v365, %v364
        %v369 = vpack.c.b16 %v367, %v366
        %vm372 = vcmask 261120
        %v374 = vsel %vm372, %v358, 0
        %v377 = vsel %vm372, %v359, 0
        %379 = vmatpush.bf16.msra.mxu0 0
        %380 = vmatpush.bf16.msra.mxu0 0
        %381 = vmatpush.bf16.msra.mxu0 0
        %382 = vmatpush.bf16.msra.mxu0 0
        %383 = vmatpush.bf16.msra.mxu0 0
        %384 = vmatpush.bf16.msra.mxu0 0
        %385 = vmatpush.bf16.msra.mxu0 %v369
        %386 = vmatpush.bf16.msra.mxu0 %v368
        %387 = vmatmul.bf16.gmra.mxu0 %v374
        %v388 = vpop.f32.mrf.mxu0
        %v389 = vadd.f32 %v348, %v388
        %v390 = vpop.f32.mrf.mxu0
        %v391 = vadd.f32 %v348, %v390
        %392 = vmatmul.bf16.gmra.mxu0 %v377
        %v393 = vpop.f32.mrf.mxu0
        %v394 = vadd.f32 %v348, %v393
        %v395 = vpop.f32.mrf.mxu0
        %v396 = vadd.f32 %v348, %v395
        %397 = vdwg.mxu0
        %398 = vst [vmem:[#allocation2] sm:$0xff] %v389
        %399 = vst [vmem:[#allocation2 + $0x8] sm:$0xff] %v391
        %400 = vst [vmem:[#allocation2 + $0x10] sm:$0xff] %v394
        %401 = vst [vmem:[#allocation2 + $0x18] sm:$0xff] %v396
        %v402 = vld [vmem:[#allocation7] sm:$0xf]
        %v403 = vld [vmem:[#allocation7 + $0x4] sm:$0xf]
        %v404 = vld [vmem:[#allocation7 + $0x8] sm:$0xf]
        %v405 = vld [vmem:[#allocation7 + $0xc] sm:$0xf]
        %v406 = vld [vmem:[%s4] sm:$0xf]
        %v407 = vld [vmem:[%s4 + $0x4] sm:$0xf]
        %v408 = vld [vmem:[%s4 + $0x8] sm:$0xf]
        %v409 = vld [vmem:[%s4 + $0xc] sm:$0xf]
        %v410 = vld [vmem:[%s4 + $0x10] sm:$0xf]
        %v411 = vld [vmem:[%s4 + $0x14] sm:$0xf]
        %v412 = vld [vmem:[%s4 + $0x18] sm:$0xf]
        %v413 = vld [vmem:[%s4 + $0x1c] sm:$0xf]
        %v414 = vld [vmem:[%s5] sm:$0x1]
        %v415 = vld [vmem:[#allocation3] sm:$0xff]
        %v416 = vld [vmem:[#allocation4] sm:$0xff]
        %v417 = vld [vmem:[#allocation5] sm:$0xff]
        %v418 = vld [vmem:[#allocation6] sm:$0xff]
        %v419 = vld [vmem:[#allocation2] sm:$0xff]
        %v420 = vpack.c.bf16 %v415, %v415
        %v425 = vunpack.c.l.b16 %v402
        %v426 = vunpack.c.l.b16 %v403
        %v427 = vunpack.c.l.b16 %v404
        %v428 = vunpack.c.l.b16 %v405
        %v429 = vpack.c.b16 %v426, %v425
        %v430 = vpack.c.b16 %v428, %v427
        %v434 = vsel %vm372, %v420, 0
        %436 = vmatpush.bf16.msra.mxu0 0
        %437 = vmatpush.bf16.msra.mxu0 0
        %438 = vmatpush.bf16.msra.mxu0 0
        %439 = vmatpush.bf16.msra.mxu0 0
        %440 = vmatpush.bf16.msra.mxu0 0
        %441 = vmatpush.bf16.msra.mxu0 0
        %442 = vmatpush.bf16.msra.mxu0 %v430
        %443 = vmatpush.bf16.msra.mxu0 %v429
        %444 = vmatmul.bf16.gmra.mxu0 %v434
        %v445 = vpop.f32.mrf.mxu0
        %v446 = vadd.f32 0.0, %v445
        %v447 = vpop.f32.mrf.mxu0
        %448 = vdwg.mxu0
        %v449 = vadd.f32 %v419, %v446
        %v450 = vxor.u32 %v449, 2147483648
        %v451 = vmul.f32 %v450, 1.442695
        %v452 = vpow.pop %v451
        %v453 = vadd.f32 %v452, 1.0
        %v454 = vrcp.pop %v453
        %v455 = vmul.f32 %v453, %v454
        %v456 = vsub.f32 1.0, %v455
        %v457 = vmul.f32 %v454, %v456
        %v458 = vadd.f32 %v454, %v457
        %vm459 = vweird.f32 %v453
        %vm460 = vweird.f32 %v454
        %vm461 = vmor %vm459, %vm460
        %v462 = vsel %vm461, %v454, %v458
        %v463 = vand.u32 2147483647, %v453
        %vm464 = vcmp.eq.f32.partialorder %v463, 8.507059e+37
        %v465 = vand.u32 %v453, 2147483648
        %v466 = vor.u32 1.1754944e-38, %v465
        %v467 = vsel %vm464, %v466, %v462
        %v468 = vmul.f32 1.0, %v467
        %v469 = vtanh.pop %v449
        %471 = vrot.lane.b32.xlu0 %v416, 32
        %v472 = vpop.permute.xlu0 %471
        %v474 = vmul.f32 %v468, %v472
        %476 = vrot.lane.b32.xlu0 %v469, 64
        %v477 = vpop.permute.xlu0 %476
        %v479 = vmul.f32 %v468, %v477
        %481 = vrot.lane.b32.xlu0 %v479, 32
        %v482 = vpop.permute.xlu0 %481
        %v484 = vadd.f32 %v474, %v482
        %v485 = vtanh.pop %v484
        %487 = vrot.lane.b32.xlu0 %v485, 64
        %v488 = vpop.permute.xlu0 %487
        %v490 = vmul.f32 %v468, %v488
        %492 = vrot.lane.b32.xlu0 %v490, 32
        %v493 = vpop.permute.xlu0 %492
        %496 = vrot.lane.b32.xlu0 %v417, 32
        %v497 = vpop.permute.xlu0 %496
        %v499 = vsel %vm372, %v493, %v497
        %v500 = vpack.c.bf16 %v499, %v499
        %v502 = vperm.slane %v414, 0
        %v512 = vunpack.c.l.b16 %v406
        %v513 = vunpack.c.l.b16 %v407
        %v514 = vunpack.c.l.b16 %v408
        %v515 = vunpack.c.l.b16 %v409
        %v516 = vunpack.c.l.b16 %v410
        %v517 = vunpack.c.l.b16 %v411
        %v518 = vunpack.c.l.b16 %v412
        %v519 = vunpack.c.l.b16 %v413
        %v520 = vpack.c.b16 %v513, %v512
        %v521 = vpack.c.b16 %v515, %v514
        %v522 = vpack.c.b16 %v517, %v516
        %v523 = vpack.c.b16 %v519, %v518
        %vm528 = vcmask 523264
        %v530 = vsel %vm528, %v500, 0
        %532 = vmatpush.bf16.msra.mxu0 0
        %533 = vmatpush.bf16.msra.mxu0 0
        %534 = vmatpush.bf16.msra.mxu0 0
        %535 = vmatpush.bf16.msra.mxu0 0
        %536 = vmatpush.bf16.msra.mxu0 %v523
        %537 = vmatpush.bf16.msra.mxu0 %v522
        %538 = vmatpush.bf16.msra.mxu0 %v521
        %539 = vmatpush.bf16.msra.mxu0 %v520
        %540 = vmatmul.bf16.gmra.mxu0 %v530
        %v541 = vpop.f32.mrf.mxu0
        %v542 = vadd.f32 %v502, %v541
        %v543 = vpop.f32.mrf.mxu0
        %544 = vdwg.mxu0
        %v545 = vxor.u32 %v542, 2147483648
        %v546 = vmul.f32 %v545, 1.442695
        %v547 = vpow.pop %v546
        %v548 = vadd.f32 %v547, 1.0
        %v549 = vrcp.pop %v548
        %v550 = vmul.f32 %v548, %v549
        %v551 = vsub.f32 1.0, %v550
        %v552 = vmul.f32 %v549, %v551
        %v553 = vadd.f32 %v549, %v552
        %vm554 = vweird.f32 %v548
        %vm555 = vweird.f32 %v549
        %vm556 = vmor %vm554, %vm555
        %v557 = vsel %vm556, %v549, %v553
        %v558 = vand.u32 2147483647, %v548
        %vm559 = vcmp.eq.f32.partialorder %v558, 8.507059e+37
        %v560 = vand.u32 %v548, 2147483648
        %v561 = vor.u32 1.1754944e-38, %v560
        %v562 = vsel %vm559, %v561, %v557
        %v563 = vmul.f32 1.0, %v562
        %v564 = vtanh.pop %v542
        %566 = vrot.lane.b32.xlu0 %v418, 32
        %v567 = vpop.permute.xlu0 %566
        %v569 = vmul.f32 %v563, %v567
        %571 = vrot.lane.b32.xlu0 %v564, 64
        %v572 = vpop.permute.xlu0 %571
        %v574 = vmul.f32 %v563, %v572
        %576 = vrot.lane.b32.xlu0 %v574, 32
        %v577 = vpop.permute.xlu0 %576
        %v579 = vadd.f32 %v569, %v577
        %v580 = vtanh.pop %v579
        %582 = vrot.lane.b32.xlu0 %v580, 64
        %v583 = vpop.permute.xlu0 %582
        %v585 = vmul.f32 %v563, %v583
        %s586 = scalar_lea.vmem [#allocation2], 8
        %v587 = vld [vmem:[%s586] sm:$0xff]
        %v588 = vpack.c.bf16 %v490, %v490
        %590 = vrot.lane.b32.xlu0 %v588, 32
        %v591 = vpop.permute.xlu0 %590
        %v593 = vsel %vm372, %v591, 0
        %595 = vmatpush.bf16.msra.mxu0 0
        %596 = vmatpush.bf16.msra.mxu0 0
        %597 = vmatpush.bf16.msra.mxu0 0
        %598 = vmatpush.bf16.msra.mxu0 0
        %599 = vmatpush.bf16.msra.mxu0 0
        %600 = vmatpush.bf16.msra.mxu0 0
        %601 = vmatpush.bf16.msra.mxu0 %v430
        %602 = vmatpush.bf16.msra.mxu0 %v429
        %603 = vmatmul.bf16.gmra.mxu0 %v593
        %v604 = vpop.f32.mrf.mxu0
        %v605 = vadd.f32 0.0, %v604
        %v606 = vpop.f32.mrf.mxu0
        %607 = vdwg.mxu0
        %v608 = vadd.f32 %v587, %v605
        %v609 = vxor.u32 %v608, 2147483648
        %v610 = vmul.f32 %v609, 1.442695
        %v611 = vpow.pop %v610
        %v612 = vadd.f32 %v611, 1.0
        %v613 = vrcp.pop %v612
        %v614 = vmul.f32 %v612, %v613
        %v615 = vsub.f32 1.0, %v614
        %v616 = vmul.f32 %v613, %v615
        %v617 = vadd.f32 %v613, %v616
        %vm618 = vweird.f32 %v612
        %vm619 = vweird.f32 %v613
        %vm620 = vmor %vm618, %vm619
        %v621 = vsel %vm620, %v613, %v617
        %v622 = vand.u32 2147483647, %v612
        %vm623 = vcmp.eq.f32.partialorder %v622, 8.507059e+37
        %v624 = vand.u32 %v612, 2147483648
        %v625 = vor.u32 1.1754944e-38, %v624
        %v626 = vsel %vm623, %v625, %v621
        %v627 = vmul.f32 1.0, %v626
        %v628 = vtanh.pop %v608
        %v629 = vmul.f32 %v627, %v484
        %631 = vrot.lane.b32.xlu0 %v628, 64
        %v632 = vpop.permute.xlu0 %631
        %v634 = vmul.f32 %v627, %v632
        %636 = vrot.lane.b32.xlu0 %v634, 32
        %v637 = vpop.permute.xlu0 %636
        %v639 = vadd.f32 %v629, %v637
        %v640 = vtanh.pop %v639
        %642 = vrot.lane.b32.xlu0 %v640, 64
        %v643 = vpop.permute.xlu0 %642
        %v645 = vmul.f32 %v627, %v643
        %647 = vrot.lane.b32.xlu0 %v645, 32
        %v648 = vpop.permute.xlu0 %647
        %651 = vrot.lane.b32.xlu0 %v585, 64
        %v652 = vpop.permute.xlu0 %651
        %v654 = vsel %vm372, %v648, %v652
        %v655 = vpack.c.bf16 %v654, %v654
        %v657 = vsel %vm528, %v655, 0
        %659 = vmatpush.bf16.msra.mxu0 0
        %660 = vmatpush.bf16.msra.mxu0 0
        %661 = vmatpush.bf16.msra.mxu0 0
        %662 = vmatpush.bf16.msra.mxu0 0
        %663 = vmatpush.bf16.msra.mxu0 %v523
        %664 = vmatpush.bf16.msra.mxu0 %v522
        %665 = vmatpush.bf16.msra.mxu0 %v521
        %666 = vmatpush.bf16.msra.mxu0 %v520
        %667 = vmatmul.bf16.gmra.mxu0 %v657
        %v668 = vpop.f32.mrf.mxu0
        %v669 = vadd.f32 %v502, %v668
        %v670 = vpop.f32.mrf.mxu0
        %671 = vdwg.mxu0
        %v672 = vxor.u32 %v669, 2147483648
        %v673 = vmul.f32 %v672, 1.442695
        %v674 = vpow.pop %v673
        %v675 = vadd.f32 %v674, 1.0
        %v676 = vrcp.pop %v675
        %v677 = vmul.f32 %v675, %v676
        %v678 = vsub.f32 1.0, %v677
        %v679 = vmul.f32 %v676, %v678
        %v680 = vadd.f32 %v676, %v679
        %vm681 = vweird.f32 %v675
        %vm682 = vweird.f32 %v676
        %vm683 = vmor %vm681, %vm682
        %v684 = vsel %vm683, %v676, %v680
        %v685 = vand.u32 2147483647, %v675
        %vm686 = vcmp.eq.f32.partialorder %v685, 8.507059e+37
        %v687 = vand.u32 %v675, 2147483648
        %v688 = vor.u32 1.1754944e-38, %v687
        %v689 = vsel %vm686, %v688, %v684
        %v690 = vmul.f32 1.0, %v689
        %v691 = vtanh.pop %v669
        %v692 = vmul.f32 %v690, %v579
        %694 = vrot.lane.b32.xlu0 %v691, 64
        %v695 = vpop.permute.xlu0 %694
        %v697 = vmul.f32 %v690, %v695
        %699 = vrot.lane.b32.xlu0 %v697, 32
        %v700 = vpop.permute.xlu0 %699
        %v702 = vadd.f32 %v692, %v700
        %v703 = vtanh.pop %v702
        %705 = vrot.lane.b32.xlu0 %v703, 64
        %v706 = vpop.permute.xlu0 %705
        %v708 = vmul.f32 %v690, %v706
        %s709 = scalar_lea.vmem [#allocation2], 16
        %v710 = vld [vmem:[%s709] sm:$0xff]
        %v711 = vpack.c.bf16 %v645, %v645
        %713 = vrot.lane.b32.xlu0 %v711, 32
        %v714 = vpop.permute.xlu0 %713
        %v716 = vsel %vm372, %v714, 0
        %718 = vmatpush.bf16.msra.mxu0 0
        %719 = vmatpush.bf16.msra.mxu0 0
        %720 = vmatpush.bf16.msra.mxu0 0
        %721 = vmatpush.bf16.msra.mxu0 0
        %722 = vmatpush.bf16.msra.mxu0 0
        %723 = vmatpush.bf16.msra.mxu0 0
        %724 = vmatpush.bf16.msra.mxu0 %v430
        %725 = vmatpush.bf16.msra.mxu0 %v429
        %726 = vmatmul.bf16.gmra.mxu0 %v716
        %v727 = vpop.f32.mrf.mxu0
        %v728 = vadd.f32 0.0, %v727
        %v729 = vpop.f32.mrf.mxu0
        %730 = vdwg.mxu0
        %v731 = vadd.f32 %v710, %v728
        %v732 = vxor.u32 %v731, 2147483648
        %v733 = vmul.f32 %v732, 1.442695
        %v734 = vpow.pop %v733
        %v735 = vadd.f32 %v734, 1.0
        %v736 = vrcp.pop %v735
        %v737 = vmul.f32 %v735, %v736
        %v738 = vsub.f32 1.0, %v737
        %v739 = vmul.f32 %v736, %v738
        %v740 = vadd.f32 %v736, %v739
        %vm741 = vweird.f32 %v735
        %vm742 = vweird.f32 %v736
        %vm743 = vmor %vm741, %vm742
        %v744 = vsel %vm743, %v736, %v740
        %v745 = vand.u32 2147483647, %v735
        %vm746 = vcmp.eq.f32.partialorder %v745, 8.507059e+37
        %v747 = vand.u32 %v735, 2147483648
        %v748 = vor.u32 1.1754944e-38, %v747
        %v749 = vsel %vm746, %v748, %v744
        %v750 = vmul.f32 1.0, %v749
        %v751 = vtanh.pop %v731
        %v752 = vmul.f32 %v750, %v639
        %754 = vrot.lane.b32.xlu0 %v751, 64
        %v755 = vpop.permute.xlu0 %754
        %v757 = vmul.f32 %v750, %v755
        %759 = vrot.lane.b32.xlu0 %v757, 32
        %v760 = vpop.permute.xlu0 %759
        %v762 = vadd.f32 %v752, %v760
        %v763 = vtanh.pop %v762
        %765 = vrot.lane.b32.xlu0 %v763, 64
        %v766 = vpop.permute.xlu0 %765
        %v768 = vmul.f32 %v750, %v766
        %770 = vrot.lane.b32.xlu0 %v768, 32
        %v771 = vpop.permute.xlu0 %770
        %774 = vrot.lane.b32.xlu0 %v708, 64
        %v775 = vpop.permute.xlu0 %774
        %v777 = vsel %vm372, %v771, %v775
        %v778 = vpack.c.bf16 %v777, %v777
        %v780 = vsel %vm528, %v778, 0
        %782 = vmatpush.bf16.msra.mxu0 0
        %783 = vmatpush.bf16.msra.mxu0 0
        %784 = vmatpush.bf16.msra.mxu0 0
        %785 = vmatpush.bf16.msra.mxu0 0
        %786 = vmatpush.bf16.msra.mxu0 %v523
        %787 = vmatpush.bf16.msra.mxu0 %v522
        %788 = vmatpush.bf16.msra.mxu0 %v521
        %789 = vmatpush.bf16.msra.mxu0 %v520
        %790 = vmatmul.bf16.gmra.mxu0 %v780
        %v791 = vpop.f32.mrf.mxu0
        %v792 = vadd.f32 %v502, %v791
        %v793 = vpop.f32.mrf.mxu0
        %794 = vdwg.mxu0
        %v795 = vxor.u32 %v792, 2147483648
        %v796 = vmul.f32 %v795, 1.442695
        %v797 = vpow.pop %v796
        %v798 = vadd.f32 %v797, 1.0
        %v799 = vrcp.pop %v798
        %v800 = vmul.f32 %v798, %v799
        %v801 = vsub.f32 1.0, %v800
        %v802 = vmul.f32 %v799, %v801
        %v803 = vadd.f32 %v799, %v802
        %vm804 = vweird.f32 %v798
        %vm805 = vweird.f32 %v799
        %vm806 = vmor %vm804, %vm805
        %v807 = vsel %vm806, %v799, %v803
        %v808 = vand.u32 2147483647, %v798
        %vm809 = vcmp.eq.f32.partialorder %v808, 8.507059e+37
        %v810 = vand.u32 %v798, 2147483648
        %v811 = vor.u32 1.1754944e-38, %v810
        %v812 = vsel %vm809, %v811, %v807
        %v813 = vmul.f32 1.0, %v812
        %v814 = vtanh.pop %v792
        %v815 = vmul.f32 %v813, %v702
        %817 = vrot.lane.b32.xlu0 %v814, 64
        %v818 = vpop.permute.xlu0 %817
        %v820 = vmul.f32 %v813, %v818
        %822 = vrot.lane.b32.xlu0 %v820, 32
        %v823 = vpop.permute.xlu0 %822
        %v825 = vadd.f32 %v815, %v823
        %v826 = vtanh.pop %v825
        %828 = vrot.lane.b32.xlu0 %v826, 64
        %v829 = vpop.permute.xlu0 %828
        %v831 = vmul.f32 %v813, %v829
        %s832 = scalar_lea.vmem [#allocation2], 24
        %v833 = vld [vmem:[%s832] sm:$0xff]
        %v834 = vpack.c.bf16 %v768, %v768
        %836 = vrot.lane.b32.xlu0 %v834, 32
        %v837 = vpop.permute.xlu0 %836
        %v839 = vsel %vm372, %v837, 0
        %841 = vmatpush.bf16.msra.mxu0 0
        %842 = vmatpush.bf16.msra.mxu0 0
        %843 = vmatpush.bf16.msra.mxu0 0
        %844 = vmatpush.bf16.msra.mxu0 0
        %845 = vmatpush.bf16.msra.mxu0 0
        %846 = vmatpush.bf16.msra.mxu0 0
        %847 = vmatpush.bf16.msra.mxu0 %v430
        %848 = vmatpush.bf16.msra.mxu0 %v429
        %849 = vmatmul.bf16.gmra.mxu0 %v839
        %v850 = vpop.f32.mrf.mxu0
        %v851 = vadd.f32 0.0, %v850
        %v852 = vpop.f32.mrf.mxu0
        %853 = vdwg.mxu0
        %v854 = vadd.f32 %v833, %v851
        %v855 = vxor.u32 %v854, 2147483648
        %v856 = vmul.f32 %v855, 1.442695
        %v857 = vpow.pop %v856
        %v858 = vadd.f32 %v857, 1.0
        %v859 = vrcp.pop %v858
        %v860 = vmul.f32 %v858, %v859
        %v861 = vsub.f32 1.0, %v860
        %v862 = vmul.f32 %v859, %v861
        %v863 = vadd.f32 %v859, %v862
        %vm864 = vweird.f32 %v858
        %vm865 = vweird.f32 %v859
        %vm866 = vmor %vm864, %vm865
        %v867 = vsel %vm866, %v859, %v863
        %v868 = vand.u32 2147483647, %v858
        %vm869 = vcmp.eq.f32.partialorder %v868, 8.507059e+37
        %v870 = vand.u32 %v858, 2147483648
        %v871 = vor.u32 1.1754944e-38, %v870
        %v872 = vsel %vm869, %v871, %v867
        %v873 = vmul.f32 1.0, %v872
        %v874 = vtanh.pop %v854
        %v875 = vmul.f32 %v873, %v762
        %877 = vrot.lane.b32.xlu0 %v874, 64
        %v878 = vpop.permute.xlu0 %877
        %v880 = vmul.f32 %v873, %v878
        %882 = vrot.lane.b32.xlu0 %v880, 32
        %v883 = vpop.permute.xlu0 %882
        %v885 = vadd.f32 %v875, %v883
        %v886 = vtanh.pop %v885
        %888 = vrot.lane.b32.xlu0 %v886, 64
        %v889 = vpop.permute.xlu0 %888
        %v891 = vmul.f32 %v873, %v889
        %893 = vrot.lane.b32.xlu0 %v891, 32
        %v894 = vpop.permute.xlu0 %893
        %897 = vrot.lane.b32.xlu0 %v831, 64
        %v898 = vpop.permute.xlu0 %897
        %v900 = vsel %vm372, %v894, %v898
        %v901 = vpack.c.bf16 %v900, %v900
        %v903 = vsel %vm528, %v901, 0
        %905 = vmatpush.bf16.msra.mxu0 0
        %906 = vmatpush.bf16.msra.mxu0 0
        %907 = vmatpush.bf16.msra.mxu0 0
        %908 = vmatpush.bf16.msra.mxu0 0
        %909 = vmatpush.bf16.msra.mxu0 %v523
        %910 = vmatpush.bf16.msra.mxu0 %v522
        %911 = vmatpush.bf16.msra.mxu0 %v521
        %912 = vmatpush.bf16.msra.mxu0 %v520
        %913 = vmatmul.bf16.gmra.mxu0 %v903
        %v914 = vpop.f32.mrf.mxu0
        %v915 = vadd.f32 %v502, %v914
        %v916 = vpop.f32.mrf.mxu0
        %917 = vdwg.mxu0
        %v918 = vxor.u32 %v915, 2147483648
        %v919 = vmul.f32 %v918, 1.442695
        %v920 = vpow.pop %v919
        %v921 = vadd.f32 %v920, 1.0
        %v922 = vrcp.pop %v921
        %v923 = vmul.f32 %v921, %v922
        %v924 = vsub.f32 1.0, %v923
        %v925 = vmul.f32 %v922, %v924
        %v926 = vadd.f32 %v922, %v925
        %vm927 = vweird.f32 %v921
        %vm928 = vweird.f32 %v922
        %vm929 = vmor %vm927, %vm928
        %v930 = vsel %vm929, %v922, %v926
        %v931 = vand.u32 2147483647, %v921
        %vm932 = vcmp.eq.f32.partialorder %v931, 8.507059e+37
        %v933 = vand.u32 %v921, 2147483648
        %v934 = vor.u32 1.1754944e-38, %v933
        %v935 = vsel %vm932, %v934, %v930
        %v936 = vmul.f32 1.0, %v935
        %v937 = vtanh.pop %v915
        %v938 = vmul.f32 %v936, %v825
        %940 = vrot.lane.b32.xlu0 %v937, 64
        %v941 = vpop.permute.xlu0 %940
        %v943 = vmul.f32 %v936, %v941
        %945 = vrot.lane.b32.xlu0 %v943, 32
        %v946 = vpop.permute.xlu0 %945
        %v948 = vadd.f32 %v938, %v946
        %v949 = vtanh.pop %v948
        %951 = vrot.lane.b32.xlu0 %v949, 64
        %v952 = vpop.permute.xlu0 %951
        %v954 = vmul.f32 %v936, %v952
        %955 = vst.msk [vmem:[#allocation3] sm:$0xff] %vm372, %v894
        %957 = vrot.lane.b32.xlu0 %v885, 96
        %v958 = vpop.permute.xlu0 %957
        %960 = vst.msk [vmem:[#allocation4] sm:$0xff] %vm372, %v958
        %962 = vrot.lane.b32.xlu0 %v954, 32
        %v963 = vpop.permute.xlu0 %962
        %965 = vst.msk [vmem:[#allocation5] sm:$0xff] %vm372, %v963
        %967 = vrot.lane.b32.xlu0 %v948, 96
        %v968 = vpop.permute.xlu0 %967
        %970 = vst.msk [vmem:[#allocation6] sm:$0xff] %vm372, %v968
        %p971 = scmp.eq.s32.totalorder %s22, 1
        // Predicated region
        $region65: #{tpu_custom_call.1} parent=51 // pred_check
          %p972 = pneg %p971
        $region66: #{tpu_custom_call.1} parent=51 // pred_check_branch
          %974 = sbr.rel (%p972) target = $region68
        $region67: #{tpu_custom_call.1} parent=51 // pred_region
          %v975 = vld [vmem:[#allocation10] sm:$0xff]
          %v976 = vld [vmem:[#allocation10 + $0x8] sm:$0xff]
          %v977 = vld [vmem:[#allocation10 + $0x10] sm:$0xff]
          %v978 = vld [vmem:[#allocation10 + $0x18] sm:$0xff]
          %v979 = vld [vmem:[%s7] sm:$0x1]
          %v981 = vperm.slane %v979, 0
          %v983 = vsel %vm372, %v963, 0
          %985 = vmatpush.msra.mxu0 0.0
          %986 = vmatpush.msra.mxu0 0.0
          %987 = vmatpush.msra.mxu0 0.0
          %988 = vmatpush.msra.mxu0 0.0
          %989 = vmatpush.msra.mxu0 0.0
          %990 = vmatpush.msra.mxu0 0.0
          %991 = vmatpush.msra.mxu0 0.0
          %992 = vmatpush.msra.mxu0 0.0
          %993 = vmatpush.msra.mxu0 0.0
          %994 = vmatpush.msra.mxu0 0.0
          %995 = vmatpush.msra.mxu0 0.0
          %996 = vmatpush.msra.mxu0 0.0
          %997 = vmatpush.msra.mxu0 %v978
          %998 = vmatpush.msra.mxu0 %v977
          %999 = vmatpush.msra.mxu0 %v976
          %1000 = vmatpush.msra.mxu0 %v975
          %1001 = vmatmul.f32.gmra.mxu0 %v983
          %v1002 = vpop.f32.mrf.mxu0
          %v1003 = vadd.f32 %v981, %v1002
          %1004 = vdwg.mxu0
          %1005 = vst [vmem:[#allocation12] sm:$0xff] %v1003
        $region68: #{tpu_custom_call.1} parent=51 // pred_fallthru
          _
        // Predicated region
        $region69: #{tpu_custom_call.1} parent=51 // pred_check
          %p1006 = pneg %p208
        $region70: #{tpu_custom_call.1} parent=51 // pred_check_branch
          %1008 = sbr.rel (%p1006) target = $region72
        $region71: #{tpu_custom_call.1} parent=51 // pred_region
          %1010 = vsyncadd [#allocation9], 0
          %s1012 = sshll.u32 [#allocation12], 4
          %s1013 = int_to_ptr.vmem [resolvable:$true] %s1012
          %s1014 = sshll.u32 %s8, 4
          %s1015 = int_to_ptr.hbm [resolvable:$true] %s1014
          %1017 = dma.vmem_to_hbm [thread:$0]  %s1013, 128, %s1015, [#allocation9]
        $region72: #{tpu_custom_call.1} parent=51 // pred_fallthru
          _
        // Predicated region
        $region73: #{tpu_custom_call.1} parent=51 // pred_check
          %p1018 = pneg %p208
        $region74: #{tpu_custom_call.1} parent=51 // pred_check_branch
          %1020 = sbr.rel (%p1018) target = $region76
        $region75: #{tpu_custom_call.1} parent=51 // pred_region
          %1022 = dma.done [#allocation9], 128
        $region76: #{tpu_custom_call.1} parent=51 // pred_fallthru
          _
      $region52: #{tpu_custom_call.1} parent=5 // pred_fallthru
        _
      %p1023 = scmp.le.s32.totalorder 2, %s17
      // Predicated region
      $region77: #{tpu_custom_call.1} parent=5 // pred_check
        %p1024 = pneg %p1023
      $region78: #{tpu_custom_call.1} parent=5 // pred_check_branch
        %1026 = sbr.rel (%p1024) target = $region80
      $region79: #{tpu_custom_call.1} parent=5 // pred_region
        %s1027 = ssub.s32 %s17, 2
      $region80: #{tpu_custom_call.1} parent=5 // pred_fallthru
        _
    $region6: #{tpu_custom_call.1} parent=1 // loop_footer
      %s21 = sadd.s32 1, %s17
    $region7: #{tpu_custom_call.1} parent=1 // loop_footer_branch
      %16 = sbr.rel target = $region3
    $region8: #{tpu_custom_call.1} parent=1 // loop_exit
      _
    %1028 = vsyncpa [#allocation8], 1
    %s1029 = scalar_lea.sflag [#allocation8], 1
    %1030 = vsyncpa %s1029, 1
    %1031 = vsyncpa [#allocation11], 1
    %1032 = vsyncpa [#allocation9], 1
    %s1033 = scalar_lea.sflag [#allocation9], 1
    %1034 = vsyncpa %s1033, 1

</llo_original>
